<compile_context>
chip_gen: v7x
topology: tpu7x:2x2x1
jax: 0.10.0
libtpu: 0.0.40
codegen_flags: <defaults>
</compile_context>

<pallas_src>
import jax
import jax.numpy as jnp
from jax.experimental import pallas as pl
from jax.experimental.pallas import tpu as pltpu


def _fused_pad_conv_act_kernel(ws_ref, bs_ref, ring_o_ref, ring_i_ref, x_ref, o_ref):
    # ws_ref    : SMEM (C_out, C_in)  conv weight / 6
    # bs_ref    : SMEM (C_out,)       (conv bias + 3) / 6
    # ring_o_ref: SMEM (C_out,)       outer-ring constant  clip(bs, 0, 1)
    # ring_i_ref: SMEM (C_out,)       inner-ring constant  clip(bs - 3*sum(ws), 0, 1)
    # x_ref     : VMEM (B, C_in, H, W)
    # o_ref     : VMEM (B, C_out, H+4, W+4)
    B, C_in, H, W = x_ref.shape
    _, C_out, Hp, Wp = o_ref.shape

    # Ring mask (computed once, reused for every output channel).
    hi = jax.lax.broadcasted_iota(jnp.int32, (B, Hp, Wp), 1)
    wi = jax.lax.broadcasted_iota(jnp.int32, (B, Hp, Wp), 2)
    is_outer = (hi == 0) | (hi == Hp - 1) | (wi == 0) | (wi == Wp - 1)

    for oc in range(C_out):
        # 1x1 conv over channels: unrolled scalar*vector MACs on the VPU.
        acc = x_ref[:, 0, :, :] * ws_ref[oc, 0]
        for ic in range(1, C_in):
            acc = acc + x_ref[:, ic, :, :] * ws_ref[oc, ic]
        y = jnp.clip(acc + bs_ref[oc], 0.0, 1.0)           # == relu6(conv+3)/6

        # Fill this output channel once in VMEM: ring constants, then interior.
        # (Multiple VMEM writes; the HBM writeback of the block happens once.)
        o_ref[:, oc, :, :] = jnp.where(is_outer, ring_o_ref[oc], ring_i_ref[oc])
        o_ref[:, oc, 2:Hp - 2, 2:Wp - 2] = y


def _pick_batch_tile(n, c, h, w):
    """Images per grid step: ~2 MiB of input per step, exact divisor of N,
    and keep >= 2 parallel steps when N >= 2 (v7x has two TensorCores)."""
    per_image_in = 4 * c * h * w
    bt = max(1, min(n, (2 * 1024 * 1024) // max(per_image_in, 1)))
    while n % bt != 0:
        bt -= 1
    if n >= 2 and n // bt < 2:
        bt = max(d for d in range(1, n // 2 + 1) if n % d == 0)
    return bt


def model_forward(x, w, b):
    """x: (N, 8, H, W) float32 NCHW.  w: (8, 8) 1x1-conv weight.  b: (8,) bias."""
    N, C, H, W = x.shape
    if not (x.ndim == 4 and w.ndim == 2 and w.shape[1] == C and b.shape == (w.shape[0],)):
        raise ValueError("model_forward expects a 1x1 conv: w (C_out, C_in), b (C_out,)")
    C_out = w.shape[0]
    Hp, Wp = H + 4, W + 4

    xf = x.astype(jnp.float32)
    # Fold "+3" and "/6" into the tiny conv parameters.
    ws = w.astype(jnp.float32) * (1.0 / 6.0)
    bs = (b.astype(jnp.float32) + 3.0) * (1.0 / 6.0)
    ring_outer = jnp.clip(bs, 0.0, 1.0)                       # conv zero-padding ring
    ring_inner = jnp.clip(bs - 3.0 * ws.sum(axis=1), 0.0, 1.0)  # value=-3 padding ring

    bt = _pick_batch_tile(N, C, H, W)
    grid = (N // bt,)
    bytes_accessed = 4 * N * (C * H * W + C_out * Hp * Wp)

    out = pl.pallas_call(
        _fused_pad_conv_act_kernel,
        out_shape=jax.ShapeDtypeStruct((N, C_out, Hp, Wp), jnp.float32),
        grid=grid,
        in_specs=[
            pl.BlockSpec(memory_space=pltpu.MemorySpace.SMEM),   # ws  (C_out, C_in)
            pl.BlockSpec(memory_space=pltpu.MemorySpace.SMEM),   # bs  (C_out,)
            pl.BlockSpec(memory_space=pltpu.MemorySpace.SMEM),   # ring_outer
            pl.BlockSpec(memory_space=pltpu.MemorySpace.SMEM),   # ring_inner
            pl.BlockSpec((bt, C, H, W), lambda i: (i, 0, 0, 0)),
        ],
        out_specs=pl.BlockSpec((bt, C_out, Hp, Wp), lambda i: (i, 0, 0, 0)),
        compiler_params=pltpu.CompilerParams(
            dimension_semantics=("parallel",)),
        cost_estimate=pl.CostEstimate(
            flops=2 * N * C_out * C * H * W,
            transcendentals=0,
            bytes_accessed=bytes_accessed),
    )(ws, bs, ring_outer, ring_inner, xf)
    return out


def _reference(x, w, b):
    # Pure-JAX reference of the original module's math.
    v1 = jnp.pad(x, ((0, 0), (0, 0), (1, 1), (1, 1)), constant_values=-3.0)
    v1p = jnp.pad(v1, ((0, 0), (0, 0), (1, 1), (1, 1)), constant_values=0.0)
    v2 = jnp.einsum('oc,nchw->nohw', w, v1p) + b[None, :, None, None]
    return jnp.clip(v2 + 3.0, 0.0, 6.0) / 6.0


if __name__ == "__main__":
    key = jax.random.PRNGKey(0)
    kx, kw, kb = jax.random.split(key, 3)

    # Small shapes consistent with the module (Conv2d(8, 8, 1) => C=8 fixed).
    N, C, H, W = 2, 8, 16, 16
    x = jax.random.normal(kx, (N, C, H, W), dtype=jnp.float32)

    # Deterministic conv parameters (weight (8,8,1,1) -> (8,8), bias (8,)).
    fan_in = C
    bound = 1.0 / (fan_in ** 0.5)
    w = jax.random.uniform(kw, (8, 8), minval=-bound, maxval=bound, dtype=jnp.float32)
    b = jax.random.uniform(kb, (8,), minval=-bound, maxval=bound, dtype=jnp.float32)

    fwd = jax.jit(model_forward)
    out = jax.block_until_ready(fwd(x, w, b))

    ref = _reference(x, w, b)
    assert out.shape == (N, 8, H + 4, W + 4), out.shape
    assert jnp.allclose(out, ref, atol=1e-5, rtol=1e-5), "mismatch vs reference"

    print("KERNEL_OK")
</pallas_src>

<mosaic_0001>
module attributes {stable_mosaic.version = 11 : i64} {
  func.func @_fused_pad_conv_act_kernel(%arg0: i32, %arg1: memref<8x8xf32, #tpu.memory_space<smem>>, %arg2: memref<8xf32, #tpu.memory_space<smem>>, %arg3: memref<8xf32, #tpu.memory_space<smem>>, %arg4: memref<8xf32, #tpu.memory_space<smem>>, %arg5: memref<1x8x16x16xf32, #tpu.memory_space<vmem>>, %arg6: memref<1x8x20x20xf32, #tpu.memory_space<vmem>>) attributes {dimension_semantics = [#tpu.dimension_semantics<parallel>], iteration_bounds = array<i64: 2>, scalar_prefetch = 0 : i64, scratch_operands = 0 : i64, tpu.core_type = #tpu.core_type<tc>, window_params = [{transform_indices = @transform_0, window_bounds = array<i64: 8, 8>}, {transform_indices = @transform_1, window_bounds = array<i64: 8>}, {transform_indices = @transform_2, window_bounds = array<i64: 8>}, {transform_indices = @transform_3, window_bounds = array<i64: 8>}, {transform_indices = @transform_4, window_bounds = array<i64: 1, 8, 16, 16>}, {transform_indices = @transform_5, window_bounds = array<i64: 1, 8, 20, 20>}]} {
    %0 = tpu.iota {dimensions = array<i32: 1>} : vector<1x20x20xi32>
    %1 = tpu.iota {dimensions = array<i32: 2>} : vector<1x20x20xi32>
    %c0_i32 = arith.constant 0 : i32
    %2 = vector.broadcast %c0_i32 : i32 to vector<1x20x20xi32>
    %3 = arith.cmpi eq, %0, %2 : vector<1x20x20xi32>
    %c19_i32 = arith.constant 19 : i32
    %4 = vector.broadcast %c19_i32 : i32 to vector<1x20x20xi32>
    %5 = arith.cmpi eq, %0, %4 : vector<1x20x20xi32>
    %6 = arith.ori %3, %5 : vector<1x20x20xi1>
    %c0_i32_0 = arith.constant 0 : i32
    %7 = vector.broadcast %c0_i32_0 : i32 to vector<1x20x20xi32>
    %8 = arith.cmpi eq, %1, %7 : vector<1x20x20xi32>
    %9 = arith.ori %6, %8 : vector<1x20x20xi1>
    %c19_i32_1 = arith.constant 19 : i32
    %10 = vector.broadcast %c19_i32_1 : i32 to vector<1x20x20xi32>
    %11 = arith.cmpi eq, %1, %10 : vector<1x20x20xi32>
    %12 = arith.ori %9, %11 : vector<1x20x20xi1>
    %c0 = arith.constant 0 : index
    %c0_2 = arith.constant 0 : index
    %c0_3 = arith.constant 0 : index
    %c0_4 = arith.constant 0 : index
    %13 = vector.load %arg5[%c0, %c0_2, %c0_3, %c0_4] : memref<1x8x16x16xf32, #tpu.memory_space<vmem>>, vector<1x1x16x16xf32>
    %14 = vector.shape_cast %13 : vector<1x1x16x16xf32> to vector<1x16x16xf32>
    %c0_5 = arith.constant 0 : index
    %c0_6 = arith.constant 0 : index
    %15 = memref.load %arg1[%c0_5, %c0_6] : memref<8x8xf32, #tpu.memory_space<smem>>
    %16 = vector.broadcast %15 : f32 to vector<1x16x16xf32>
    %17 = arith.mulf %14, %16 : vector<1x16x16xf32>
    %c0_7 = arith.constant 0 : index
    %c1 = arith.constant 1 : index
    %c0_8 = arith.constant 0 : index
    %c0_9 = arith.constant 0 : index
    %18 = vector.load %arg5[%c0_7, %c1, %c0_8, %c0_9] : memref<1x8x16x16xf32, #tpu.memory_space<vmem>>, vector<1x1x16x16xf32>
    %19 = vector.shape_cast %18 : vector<1x1x16x16xf32> to vector<1x16x16xf32>
    %c0_10 = arith.constant 0 : index
    %c1_11 = arith.constant 1 : index
    %20 = memref.load %arg1[%c0_10, %c1_11] : memref<8x8xf32, #tpu.memory_space<smem>>
    %21 = vector.broadcast %20 : f32 to vector<1x16x16xf32>
    %22 = arith.mulf %19, %21 : vector<1x16x16xf32>
    %23 = arith.addf %17, %22 : vector<1x16x16xf32>
    %c0_12 = arith.constant 0 : index
    %c2 = arith.constant 2 : index
    %c0_13 = arith.constant 0 : index
    %c0_14 = arith.constant 0 : index
    %24 = vector.load %arg5[%c0_12, %c2, %c0_13, %c0_14] : memref<1x8x16x16xf32, #tpu.memory_space<vmem>>, vector<1x1x16x16xf32>
    %25 = vector.shape_cast %24 : vector<1x1x16x16xf32> to vector<1x16x16xf32>
    %c0_15 = arith.constant 0 : index
    %c2_16 = arith.constant 2 : index
    %26 = memref.load %arg1[%c0_15, %c2_16] : memref<8x8xf32, #tpu.memory_space<smem>>
    %27 = vector.broadcast %26 : f32 to vector<1x16x16xf32>
    %28 = arith.mulf %25, %27 : vector<1x16x16xf32>
    %29 = arith.addf %23, %28 : vector<1x16x16xf32>
    %c0_17 = arith.constant 0 : index
    %c3 = arith.constant 3 : index
    %c0_18 = arith.constant 0 : index
    %c0_19 = arith.constant 0 : index
    %30 = vector.load %arg5[%c0_17, %c3, %c0_18, %c0_19] : memref<1x8x16x16xf32, #tpu.memory_space<vmem>>, vector<1x1x16x16xf32>
    %31 = vector.shape_cast %30 : vector<1x1x16x16xf32> to vector<1x16x16xf32>
    %c0_20 = arith.constant 0 : index
    %c3_21 = arith.constant 3 : index
    %32 = memref.load %arg1[%c0_20, %c3_21] : memref<8x8xf32, #tpu.memory_space<smem>>
    %33 = vector.broadcast %32 : f32 to vector<1x16x16xf32>
    %34 = arith.mulf %31, %33 : vector<1x16x16xf32>
    %35 = arith.addf %29, %34 : vector<1x16x16xf32>
    %c0_22 = arith.constant 0 : index
    %c4 = arith.constant 4 : index
    %c0_23 = arith.constant 0 : index
    %c0_24 = arith.constant 0 : index
    %36 = vector.load %arg5[%c0_22, %c4, %c0_23, %c0_24] : memref<1x8x16x16xf32, #tpu.memory_space<vmem>>, vector<1x1x16x16xf32>
    %37 = vector.shape_cast %36 : vector<1x1x16x16xf32> to vector<1x16x16xf32>
    %c0_25 = arith.constant 0 : index
    %c4_26 = arith.constant 4 : index
    %38 = memref.load %arg1[%c0_25, %c4_26] : memref<8x8xf32, #tpu.memory_space<smem>>
    %39 = vector.broadcast %38 : f32 to vector<1x16x16xf32>
    %40 = arith.mulf %37, %39 : vector<1x16x16xf32>
    %41 = arith.addf %35, %40 : vector<1x16x16xf32>
    %c0_27 = arith.constant 0 : index
    %c5 = arith.constant 5 : index
    %c0_28 = arith.constant 0 : index
    %c0_29 = arith.constant 0 : index
    %42 = vector.load %arg5[%c0_27, %c5, %c0_28, %c0_29] : memref<1x8x16x16xf32, #tpu.memory_space<vmem>>, vector<1x1x16x16xf32>
    %43 = vector.shape_cast %42 : vector<1x1x16x16xf32> to vector<1x16x16xf32>
    %c0_30 = arith.constant 0 : index
    %c5_31 = arith.constant 5 : index
    %44 = memref.load %arg1[%c0_30, %c5_31] : memref<8x8xf32, #tpu.memory_space<smem>>
    %45 = vector.broadcast %44 : f32 to vector<1x16x16xf32>
    %46 = arith.mulf %43, %45 : vector<1x16x16xf32>
    %47 = arith.addf %41, %46 : vector<1x16x16xf32>
    %c0_32 = arith.constant 0 : index
    %c6 = arith.constant 6 : index
    %c0_33 = arith.constant 0 : index
    %c0_34 = arith.constant 0 : index
    %48 = vector.load %arg5[%c0_32, %c6, %c0_33, %c0_34] : memref<1x8x16x16xf32, #tpu.memory_space<vmem>>, vector<1x1x16x16xf32>
    %49 = vector.shape_cast %48 : vector<1x1x16x16xf32> to vector<1x16x16xf32>
    %c0_35 = arith.constant 0 : index
    %c6_36 = arith.constant 6 : index
    %50 = memref.load %arg1[%c0_35, %c6_36] : memref<8x8xf32, #tpu.memory_space<smem>>
    %51 = vector.broadcast %50 : f32 to vector<1x16x16xf32>
    %52 = arith.mulf %49, %51 : vector<1x16x16xf32>
    %53 = arith.addf %47, %52 : vector<1x16x16xf32>
    %c0_37 = arith.constant 0 : index
    %c7 = arith.constant 7 : index
    %c0_38 = arith.constant 0 : index
    %c0_39 = arith.constant 0 : index
    %54 = vector.load %arg5[%c0_37, %c7, %c0_38, %c0_39] : memref<1x8x16x16xf32, #tpu.memory_space<vmem>>, vector<1x1x16x16xf32>
    %55 = vector.shape_cast %54 : vector<1x1x16x16xf32> to vector<1x16x16xf32>
    %c0_40 = arith.constant 0 : index
    %c7_41 = arith.constant 7 : index
    %56 = memref.load %arg1[%c0_40, %c7_41] : memref<8x8xf32, #tpu.memory_space<smem>>
    %57 = vector.broadcast %56 : f32 to vector<1x16x16xf32>
    %58 = arith.mulf %55, %57 : vector<1x16x16xf32>
    %59 = arith.addf %53, %58 : vector<1x16x16xf32>
    %c0_42 = arith.constant 0 : index
    %60 = memref.load %arg2[%c0_42] : memref<8xf32, #tpu.memory_space<smem>>
    %61 = vector.broadcast %60 : f32 to vector<1x16x16xf32>
    %62 = arith.addf %59, %61 : vector<1x16x16xf32>
    %cst = arith.constant 0.000000e+00 : f32
    %cst_43 = arith.constant 1.000000e+00 : f32
    %63 = vector.broadcast %cst : f32 to vector<1x16x16xf32>
    %64 = arith.maximumf %63, %62 : vector<1x16x16xf32>
    %65 = vector.broadcast %cst_43 : f32 to vector<1x16x16xf32>
    %66 = arith.minimumf %65, %64 : vector<1x16x16xf32>
    %c0_44 = arith.constant 0 : index
    %67 = memref.load %arg3[%c0_44] : memref<8xf32, #tpu.memory_space<smem>>
    %c0_45 = arith.constant 0 : index
    %68 = memref.load %arg4[%c0_45] : memref<8xf32, #tpu.memory_space<smem>>
    %69 = vector.broadcast %67 : f32 to vector<1x20x20xf32>
    %70 = vector.broadcast %68 : f32 to vector<1x20x20xf32>
    %71 = arith.select %12, %69, %70 : vector<1x20x20xi1>, vector<1x20x20xf32>
    %c0_46 = arith.constant 0 : index
    %c0_47 = arith.constant 0 : index
    %c0_48 = arith.constant 0 : index
    %c0_49 = arith.constant 0 : index
    %72 = vector.load %arg6[%c0_46, %c0_47, %c0_48, %c0_49] : memref<1x8x20x20xf32, #tpu.memory_space<vmem>>, vector<1x1x20x20xf32>
    %73 = vector.shape_cast %72 : vector<1x1x20x20xf32> to vector<1x20x20xf32>
    %74 = vector.shape_cast %71 : vector<1x20x20xf32> to vector<1x1x20x20xf32>
    tpu.vector_store %arg6[%c0_46, %c0_47, %c0_48, %c0_49], %74 {strides = array<i32>} : memref<1x8x20x20xf32, #tpu.memory_space<vmem>>, vector<1x1x20x20xf32>,
    %c0_50 = arith.constant 0 : index
    %c0_51 = arith.constant 0 : index
    %c2_52 = arith.constant 2 : index
    %c2_53 = arith.constant 2 : index
    %75 = vector.load %arg6[%c0_50, %c0_51, %c2_52, %c2_53] : memref<1x8x20x20xf32, #tpu.memory_space<vmem>>, vector<1x1x16x16xf32>
    %76 = vector.shape_cast %75 : vector<1x1x16x16xf32> to vector<1x16x16xf32>
    %77 = vector.shape_cast %66 : vector<1x16x16xf32> to vector<1x1x16x16xf32>
    tpu.vector_store %arg6[%c0_50, %c0_51, %c2_52, %c2_53], %77 {strides = array<i32>} : memref<1x8x20x20xf32, #tpu.memory_space<vmem>>, vector<1x1x16x16xf32>,
    %c0_54 = arith.constant 0 : index
    %c0_55 = arith.constant 0 : index
    %c0_56 = arith.constant 0 : index
    %c0_57 = arith.constant 0 : index
    %78 = vector.load %arg5[%c0_54, %c0_55, %c0_56, %c0_57] : memref<1x8x16x16xf32, #tpu.memory_space<vmem>>, vector<1x1x16x16xf32>
    %79 = vector.shape_cast %78 : vector<1x1x16x16xf32> to vector<1x16x16xf32>
    %c1_58 = arith.constant 1 : index
    %c0_59 = arith.constant 0 : index
    %80 = memref.load %arg1[%c1_58, %c0_59] : memref<8x8xf32, #tpu.memory_space<smem>>
    %81 = vector.broadcast %80 : f32 to vector<1x16x16xf32>
    %82 = arith.mulf %79, %81 : vector<1x16x16xf32>
    %c0_60 = arith.constant 0 : index
    %c1_61 = arith.constant 1 : index
    %c0_62 = arith.constant 0 : index
    %c0_63 = arith.constant 0 : index
    %83 = vector.load %arg5[%c0_60, %c1_61, %c0_62, %c0_63] : memref<1x8x16x16xf32, #tpu.memory_space<vmem>>, vector<1x1x16x16xf32>
    %84 = vector.shape_cast %83 : vector<1x1x16x16xf32> to vector<1x16x16xf32>
    %c1_64 = arith.constant 1 : index
    %c1_65 = arith.constant 1 : index
    %85 = memref.load %arg1[%c1_64, %c1_65] : memref<8x8xf32, #tpu.memory_space<smem>>
    %86 = vector.broadcast %85 : f32 to vector<1x16x16xf32>
    %87 = arith.mulf %84, %86 : vector<1x16x16xf32>
    %88 = arith.addf %82, %87 : vector<1x16x16xf32>
    %c0_66 = arith.constant 0 : index
    %c2_67 = arith.constant 2 : index
    %c0_68 = arith.constant 0 : index
    %c0_69 = arith.constant 0 : index
    %89 = vector.load %arg5[%c0_66, %c2_67, %c0_68, %c0_69] : memref<1x8x16x16xf32, #tpu.memory_space<vmem>>, vector<1x1x16x16xf32>
    %90 = vector.shape_cast %89 : vector<1x1x16x16xf32> to vector<1x16x16xf32>
    %c1_70 = arith.constant 1 : index
    %c2_71 = arith.constant 2 : index
    %91 = memref.load %arg1[%c1_70, %c2_71] : memref<8x8xf32, #tpu.memory_space<smem>>
    %92 = vector.broadcast %91 : f32 to vector<1x16x16xf32>
    %93 = arith.mulf %90, %92 : vector<1x16x16xf32>
    %94 = arith.addf %88, %93 : vector<1x16x16xf32>
    %c0_72 = arith.constant 0 : index
    %c3_73 = arith.constant 3 : index
    %c0_74 = arith.constant 0 : index
    %c0_75 = arith.constant 0 : index
    %95 = vector.load %arg5[%c0_72, %c3_73, %c0_74, %c0_75] : memref<1x8x16x16xf32, #tpu.memory_space<vmem>>, vector<1x1x16x16xf32>
    %96 = vector.shape_cast %95 : vector<1x1x16x16xf32> to vector<1x16x16xf32>
    %c1_76 = arith.constant 1 : index
    %c3_77 = arith.constant 3 : index
    %97 = memref.load %arg1[%c1_76, %c3_77] : memref<8x8xf32, #tpu.memory_space<smem>>
    %98 = vector.broadcast %97 : f32 to vector<1x16x16xf32>
    %99 = arith.mulf %96, %98 : vector<1x16x16xf32>
    %100 = arith.addf %94, %99 : vector<1x16x16xf32>
    %c0_78 = arith.constant 0 : index
    %c4_79 = arith.constant 4 : index
    %c0_80 = arith.constant 0 : index
    %c0_81 = arith.constant 0 : index
    %101 = vector.load %arg5[%c0_78, %c4_79, %c0_80, %c0_81] : memref<1x8x16x16xf32, #tpu.memory_space<vmem>>, vector<1x1x16x16xf32>
    %102 = vector.shape_cast %101 : vector<1x1x16x16xf32> to vector<1x16x16xf32>
    %c1_82 = arith.constant 1 : index
    %c4_83 = arith.constant 4 : index
    %103 = memref.load %arg1[%c1_82, %c4_83] : memref<8x8xf32, #tpu.memory_space<smem>>
    %104 = vector.broadcast %103 : f32 to vector<1x16x16xf32>
    %105 = arith.mulf %102, %104 : vector<1x16x16xf32>
    %106 = arith.addf %100, %105 : vector<1x16x16xf32>
    %c0_84 = arith.constant 0 : index
    %c5_85 = arith.constant 5 : index
    %c0_86 = arith.constant 0 : index
    %c0_87 = arith.constant 0 : index
    %107 = vector.load %arg5[%c0_84, %c5_85, %c0_86, %c0_87] : memref<1x8x16x16xf32, #tpu.memory_space<vmem>>, vector<1x1x16x16xf32>
    %108 = vector.shape_cast %107 : vector<1x1x16x16xf32> to vector<1x16x16xf32>
    %c1_88 = arith.constant 1 : index
    %c5_89 = arith.constant 5 : index
    %109 = memref.load %arg1[%c1_88, %c5_89] : memref<8x8xf32, #tpu.memory_space<smem>>
    %110 = vector.broadcast %109 : f32 to vector<1x16x16xf32>
    %111 = arith.mulf %108, %110 : vector<1x16x16xf32>
    %112 = arith.addf %106, %111 : vector<1x16x16xf32>
    %c0_90 = arith.constant 0 : index
    %c6_91 = arith.constant 6 : index
    %c0_92 = arith.constant 0 : index
    %c0_93 = arith.constant 0 : index
    %113 = vector.load %arg5[%c0_90, %c6_91, %c0_92, %c0_93] : memref<1x8x16x16xf32, #tpu.memory_space<vmem>>, vector<1x1x16x16xf32>
    %114 = vector.shape_cast %113 : vector<1x1x16x16xf32> to vector<1x16x16xf32>
    %c1_94 = arith.constant 1 : index
    %c6_95 = arith.constant 6 : index
    %115 = memref.load %arg1[%c1_94, %c6_95] : memref<8x8xf32, #tpu.memory_space<smem>>
    %116 = vector.broadcast %115 : f32 to vector<1x16x16xf32>
    %117 = arith.mulf %114, %116 : vector<1x16x16xf32>
    %118 = arith.addf %112, %117 : vector<1x16x16xf32>
    %c0_96 = arith.constant 0 : index
    %c7_97 = arith.constant 7 : index
    %c0_98 = arith.constant 0 : index
    %c0_99 = arith.constant 0 : index
    %119 = vector.load %arg5[%c0_96, %c7_97, %c0_98, %c0_99] : memref<1x8x16x16xf32, #tpu.memory_space<vmem>>, vector<1x1x16x16xf32>
    %120 = vector.shape_cast %119 : vector<1x1x16x16xf32> to vector<1x16x16xf32>
    %c1_100 = arith.constant 1 : index
    %c7_101 = arith.constant 7 : index
    %121 = memref.load %arg1[%c1_100, %c7_101] : memref<8x8xf32, #tpu.memory_space<smem>>
    %122 = vector.broadcast %121 : f32 to vector<1x16x16xf32>
    %123 = arith.mulf %120, %122 : vector<1x16x16xf32>
    %124 = arith.addf %118, %123 : vector<1x16x16xf32>
    %c1_102 = arith.constant 1 : index
    %125 = memref.load %arg2[%c1_102] : memref<8xf32, #tpu.memory_space<smem>>
    %126 = vector.broadcast %125 : f32 to vector<1x16x16xf32>
    %127 = arith.addf %124, %126 : vector<1x16x16xf32>
    %cst_103 = arith.constant 0.000000e+00 : f32
    %cst_104 = arith.constant 1.000000e+00 : f32
    %128 = vector.broadcast %cst_103 : f32 to vector<1x16x16xf32>
    %129 = arith.maximumf %128, %127 : vector<1x16x16xf32>
    %130 = vector.broadcast %cst_104 : f32 to vector<1x16x16xf32>
    %131 = arith.minimumf %130, %129 : vector<1x16x16xf32>
    %c1_105 = arith.constant 1 : index
    %132 = memref.load %arg3[%c1_105] : memref<8xf32, #tpu.memory_space<smem>>
    %c1_106 = arith.constant 1 : index
    %133 = memref.load %arg4[%c1_106] : memref<8xf32, #tpu.memory_space<smem>>
    %134 = vector.broadcast %132 : f32 to vector<1x20x20xf32>
    %135 = vector.broadcast %133 : f32 to vector<1x20x20xf32>
    %136 = arith.select %12, %134, %135 : vector<1x20x20xi1>, vector<1x20x20xf32>
    %c0_107 = arith.constant 0 : index
    %c1_108 = arith.constant 1 : index
    %c0_109 = arith.constant 0 : index
    %c0_110 = arith.constant 0 : index
    %137 = vector.load %arg6[%c0_107, %c1_108, %c0_109, %c0_110] : memref<1x8x20x20xf32, #tpu.memory_space<vmem>>, vector<1x1x20x20xf32>
    %138 = vector.shape_cast %137 : vector<1x1x20x20xf32> to vector<1x20x20xf32>
    %139 = vector.shape_cast %136 : vector<1x20x20xf32> to vector<1x1x20x20xf32>
    tpu.vector_store %arg6[%c0_107, %c1_108, %c0_109, %c0_110], %139 {strides = array<i32>} : memref<1x8x20x20xf32, #tpu.memory_space<vmem>>, vector<1x1x20x20xf32>,
    %c0_111 = arith.constant 0 : index
    %c1_112 = arith.constant 1 : index
    %c2_113 = arith.constant 2 : index
    %c2_114 = arith.constant 2 : index
    %140 = vector.load %arg6[%c0_111, %c1_112, %c2_113, %c2_114] : memref<1x8x20x20xf32, #tpu.memory_space<vmem>>, vector<1x1x16x16xf32>
    %141 = vector.shape_cast %140 : vector<1x1x16x16xf32> to vector<1x16x16xf32>
    %142 = vector.shape_cast %131 : vector<1x16x16xf32> to vector<1x1x16x16xf32>
    tpu.vector_store %arg6[%c0_111, %c1_112, %c2_113, %c2_114], %142 {strides = array<i32>} : memref<1x8x20x20xf32, #tpu.memory_space<vmem>>, vector<1x1x16x16xf32>,
    %c0_115 = arith.constant 0 : index
    %c0_116 = arith.constant 0 : index
    %c0_117 = arith.constant 0 : index
    %c0_118 = arith.constant 0 : index
    %143 = vector.load %arg5[%c0_115, %c0_116, %c0_117, %c0_118] : memref<1x8x16x16xf32, #tpu.memory_space<vmem>>, vector<1x1x16x16xf32>
    %144 = vector.shape_cast %143 : vector<1x1x16x16xf32> to vector<1x16x16xf32>
    %c2_119 = arith.constant 2 : index
    %c0_120 = arith.constant 0 : index
    %145 = memref.load %arg1[%c2_119, %c0_120] : memref<8x8xf32, #tpu.memory_space<smem>>
    %146 = vector.broadcast %145 : f32 to vector<1x16x16xf32>
    %147 = arith.mulf %144, %146 : vector<1x16x16xf32>
    %c0_121 = arith.constant 0 : index
    %c1_122 = arith.constant 1 : index
    %c0_123 = arith.constant 0 : index
    %c0_124 = arith.constant 0 : index
    %148 = vector.load %arg5[%c0_121, %c1_122, %c0_123, %c0_124] : memref<1x8x16x16xf32, #tpu.memory_space<vmem>>, vector<1x1x16x16xf32>
    %149 = vector.shape_cast %148 : vector<1x1x16x16xf32> to vector<1x16x16xf32>
    %c2_125 = arith.constant 2 : index
    %c1_126 = arith.constant 1 : index
    %150 = memref.load %arg1[%c2_125, %c1_126] : memref<8x8xf32, #tpu.memory_space<smem>>
    %151 = vector.broadcast %150 : f32 to vector<1x16x16xf32>
    %152 = arith.mulf %149, %151 : vector<1x16x16xf32>
    %153 = arith.addf %147, %152 : vector<1x16x16xf32>
    %c0_127 = arith.constant 0 : index
    %c2_128 = arith.constant 2 : index
    %c0_129 = arith.constant 0 : index
    %c0_130 = arith.constant 0 : index
    %154 = vector.load %arg5[%c0_127, %c2_128, %c0_129, %c0_130] : memref<1x8x16x16xf32, #tpu.memory_space<vmem>>, vector<1x1x16x16xf32>
    %155 = vector.shape_cast %154 : vector<1x1x16x16xf32> to vector<1x16x16xf32>
    %c2_131 = arith.constant 2 : index
    %c2_132 = arith.constant 2 : index
    %156 = memref.load %arg1[%c2_131, %c2_132] : memref<8x8xf32, #tpu.memory_space<smem>>
    %157 = vector.broadcast %156 : f32 to vector<1x16x16xf32>
    %158 = arith.mulf %155, %157 : vector<1x16x16xf32>
    %159 = arith.addf %153, %158 : vector<1x16x16xf32>
    %c0_133 = arith.constant 0 : index
    %c3_134 = arith.constant 3 : index
    %c0_135 = arith.constant 0 : index
    %c0_136 = arith.constant 0 : index
    %160 = vector.load %arg5[%c0_133, %c3_134, %c0_135, %c0_136] : memref<1x8x16x16xf32, #tpu.memory_space<vmem>>, vector<1x1x16x16xf32>
    %161 = vector.shape_cast %160 : vector<1x1x16x16xf32> to vector<1x16x16xf32>
    %c2_137 = arith.constant 2 : index
    %c3_138 = arith.constant 3 : index
    %162 = memref.load %arg1[%c2_137, %c3_138] : memref<8x8xf32, #tpu.memory_space<smem>>
    %163 = vector.broadcast %162 : f32 to vector<1x16x16xf32>
    %164 = arith.mulf %161, %163 : vector<1x16x16xf32>
    %165 = arith.addf %159, %164 : vector<1x16x16xf32>
    %c0_139 = arith.constant 0 : index
    %c4_140 = arith.constant 4 : index
    %c0_141 = arith.constant 0 : index
    %c0_142 = arith.constant 0 : index
    %166 = vector.load %arg5[%c0_139, %c4_140, %c0_141, %c0_142] : memref<1x8x16x16xf32, #tpu.memory_space<vmem>>, vector<1x1x16x16xf32>
    %167 = vector.shape_cast %166 : vector<1x1x16x16xf32> to vector<1x16x16xf32>
    %c2_143 = arith.constant 2 : index
    %c4_144 = arith.constant 4 : index
    %168 = memref.load %arg1[%c2_143, %c4_144] : memref<8x8xf32, #tpu.memory_space<smem>>
    %169 = vector.broadcast %168 : f32 to vector<1x16x16xf32>
    %170 = arith.mulf %167, %169 : vector<1x16x16xf32>
    %171 = arith.addf %165, %170 : vector<1x16x16xf32>
    %c0_145 = arith.constant 0 : index
    %c5_146 = arith.constant 5 : index
    %c0_147 = arith.constant 0 : index
    %c0_148 = arith.constant 0 : index
    %172 = vector.load %arg5[%c0_145, %c5_146, %c0_147, %c0_148] : memref<1x8x16x16xf32, #tpu.memory_space<vmem>>, vector<1x1x16x16xf32>
    %173 = vector.shape_cast %172 : vector<1x1x16x16xf32> to vector<1x16x16xf32>
    %c2_149 = arith.constant 2 : index
    %c5_150 = arith.constant 5 : index
    %174 = memref.load %arg1[%c2_149, %c5_150] : memref<8x8xf32, #tpu.memory_space<smem>>
    %175 = vector.broadcast %174 : f32 to vector<1x16x16xf32>
    %176 = arith.mulf %173, %175 : vector<1x16x16xf32>
    %177 = arith.addf %171, %176 : vector<1x16x16xf32>
    %c0_151 = arith.constant 0 : index
    %c6_152 = arith.constant 6 : index
    %c0_153 = arith.constant 0 : index
    %c0_154 = arith.constant 0 : index
    %178 = vector.load %arg5[%c0_151, %c6_152, %c0_153, %c0_154] : memref<1x8x16x16xf32, #tpu.memory_space<vmem>>, vector<1x1x16x16xf32>
    %179 = vector.shape_cast %178 : vector<1x1x16x16xf32> to vector<1x16x16xf32>
    %c2_155 = arith.constant 2 : index
    %c6_156 = arith.constant 6 : index
    %180 = memref.load %arg1[%c2_155, %c6_156] : memref<8x8xf32, #tpu.memory_space<smem>>
    %181 = vector.broadcast %180 : f32 to vector<1x16x16xf32>
    %182 = arith.mulf %179, %181 : vector<1x16x16xf32>
    %183 = arith.addf %177, %182 : vector<1x16x16xf32>
    %c0_157 = arith.constant 0 : index
    %c7_158 = arith.constant 7 : index
    %c0_159 = arith.constant 0 : index
    %c0_160 = arith.constant 0 : index
    %184 = vector.load %arg5[%c0_157, %c7_158, %c0_159, %c0_160] : memref<1x8x16x16xf32, #tpu.memory_space<vmem>>, vector<1x1x16x16xf32>
    %185 = vector.shape_cast %184 : vector<1x1x16x16xf32> to vector<1x16x16xf32>
    %c2_161 = arith.constant 2 : index
    %c7_162 = arith.constant 7 : index
    %186 = memref.load %arg1[%c2_161, %c7_162] : memref<8x8xf32, #tpu.memory_space<smem>>
    %187 = vector.broadcast %186 : f32 to vector<1x16x16xf32>
    %188 = arith.mulf %185, %187 : vector<1x16x16xf32>
    %189 = arith.addf %183, %188 : vector<1x16x16xf32>
    %c2_163 = arith.constant 2 : index
    %190 = memref.load %arg2[%c2_163] : memref<8xf32, #tpu.memory_space<smem>>
    %191 = vector.broadcast %190 : f32 to vector<1x16x16xf32>
    %192 = arith.addf %189, %191 : vector<1x16x16xf32>
    %cst_164 = arith.constant 0.000000e+00 : f32
    %cst_165 = arith.constant 1.000000e+00 : f32
    %193 = vector.broadcast %cst_164 : f32 to vector<1x16x16xf32>
    %194 = arith.maximumf %193, %192 : vector<1x16x16xf32>
    %195 = vector.broadcast %cst_165 : f32 to vector<1x16x16xf32>
    %196 = arith.minimumf %195, %194 : vector<1x16x16xf32>
    %c2_166 = arith.constant 2 : index
    %197 = memref.load %arg3[%c2_166] : memref<8xf32, #tpu.memory_space<smem>>
    %c2_167 = arith.constant 2 : index
    %198 = memref.load %arg4[%c2_167] : memref<8xf32, #tpu.memory_space<smem>>
    %199 = vector.broadcast %197 : f32 to vector<1x20x20xf32>
    %200 = vector.broadcast %198 : f32 to vector<1x20x20xf32>
    %201 = arith.select %12, %199, %200 : vector<1x20x20xi1>, vector<1x20x20xf32>
    %c0_168 = arith.constant 0 : index
    %c2_169 = arith.constant 2 : index
    %c0_170 = arith.constant 0 : index
    %c0_171 = arith.constant 0 : index
    %202 = vector.load %arg6[%c0_168, %c2_169, %c0_170, %c0_171] : memref<1x8x20x20xf32, #tpu.memory_space<vmem>>, vector<1x1x20x20xf32>
    %203 = vector.shape_cast %202 : vector<1x1x20x20xf32> to vector<1x20x20xf32>
    %204 = vector.shape_cast %201 : vector<1x20x20xf32> to vector<1x1x20x20xf32>
    tpu.vector_store %arg6[%c0_168, %c2_169, %c0_170, %c0_171], %204 {strides = array<i32>} : memref<1x8x20x20xf32, #tpu.memory_space<vmem>>, vector<1x1x20x20xf32>,
    %c0_172 = arith.constant 0 : index
    %c2_173 = arith.constant 2 : index
    %c2_174 = arith.constant 2 : index
    %c2_175 = arith.constant 2 : index
    %205 = vector.load %arg6[%c0_172, %c2_173, %c2_174, %c2_175] : memref<1x8x20x20xf32, #tpu.memory_space<vmem>>, vector<1x1x16x16xf32>
    %206 = vector.shape_cast %205 : vector<1x1x16x16xf32> to vector<1x16x16xf32>
    %207 = vector.shape_cast %196 : vector<1x16x16xf32> to vector<1x1x16x16xf32>
    tpu.vector_store %arg6[%c0_172, %c2_173, %c2_174, %c2_175], %207 {strides = array<i32>} : memref<1x8x20x20xf32, #tpu.memory_space<vmem>>, vector<1x1x16x16xf32>,
    %c0_176 = arith.constant 0 : index
    %c0_177 = arith.constant 0 : index
    %c0_178 = arith.constant 0 : index
    %c0_179 = arith.constant 0 : index
    %208 = vector.load %arg5[%c0_176, %c0_177, %c0_178, %c0_179] : memref<1x8x16x16xf32, #tpu.memory_space<vmem>>, vector<1x1x16x16xf32>
    %209 = vector.shape_cast %208 : vector<1x1x16x16xf32> to vector<1x16x16xf32>
    %c3_180 = arith.constant 3 : index
    %c0_181 = arith.constant 0 : index
    %210 = memref.load %arg1[%c3_180, %c0_181] : memref<8x8xf32, #tpu.memory_space<smem>>
    %211 = vector.broadcast %210 : f32 to vector<1x16x16xf32>
    %212 = arith.mulf %209, %211 : vector<1x16x16xf32>
    %c0_182 = arith.constant 0 : index
    %c1_183 = arith.constant 1 : index
    %c0_184 = arith.constant 0 : index
    %c0_185 = arith.constant 0 : index
    %213 = vector.load %arg5[%c0_182, %c1_183, %c0_184, %c0_185] : memref<1x8x16x16xf32, #tpu.memory_space<vmem>>, vector<1x1x16x16xf32>
    %214 = vector.shape_cast %213 : vector<1x1x16x16xf32> to vector<1x16x16xf32>
    %c3_186 = arith.constant 3 : index
    %c1_187 = arith.constant 1 : index
    %215 = memref.load %arg1[%c3_186, %c1_187] : memref<8x8xf32, #tpu.memory_space<smem>>
    %216 = vector.broadcast %215 : f32 to vector<1x16x16xf32>
    %217 = arith.mulf %214, %216 : vector<1x16x16xf32>
    %218 = arith.addf %212, %217 : vector<1x16x16xf32>
    %c0_188 = arith.constant 0 : index
    %c2_189 = arith.constant 2 : index
    %c0_190 = arith.constant 0 : index
    %c0_191 = arith.constant 0 : index
    %219 = vector.load %arg5[%c0_188, %c2_189, %c0_190, %c0_191] : memref<1x8x16x16xf32, #tpu.memory_space<vmem>>, vector<1x1x16x16xf32>
    %220 = vector.shape_cast %219 : vector<1x1x16x16xf32> to vector<1x16x16xf32>
    %c3_192 = arith.constant 3 : index
    %c2_193 = arith.constant 2 : index
    %221 = memref.load %arg1[%c3_192, %c2_193] : memref<8x8xf32, #tpu.memory_space<smem>>
    %222 = vector.broadcast %221 : f32 to vector<1x16x16xf32>
    %223 = arith.mulf %220, %222 : vector<1x16x16xf32>
    %224 = arith.addf %218, %223 : vector<1x16x16xf32>
    %c0_194 = arith.constant 0 : index
    %c3_195 = arith.constant 3 : index
    %c0_196 = arith.constant 0 : index
    %c0_197 = arith.constant 0 : index
    %225 = vector.load %arg5[%c0_194, %c3_195, %c0_196, %c0_197] : memref<1x8x16x16xf32, #tpu.memory_space<vmem>>, vector<1x1x16x16xf32>
    %226 = vector.shape_cast %225 : vector<1x1x16x16xf32> to vector<1x16x16xf32>
    %c3_198 = arith.constant 3 : index
    %c3_199 = arith.constant 3 : index
    %227 = memref.load %arg1[%c3_198, %c3_199] : memref<8x8xf32, #tpu.memory_space<smem>>
    %228 = vector.broadcast %227 : f32 to vector<1x16x16xf32>
    %229 = arith.mulf %226, %228 : vector<1x16x16xf32>
    %230 = arith.addf %224, %229 : vector<1x16x16xf32>
    %c0_200 = arith.constant 0 : index
    %c4_201 = arith.constant 4 : index
    %c0_202 = arith.constant 0 : index
    %c0_203 = arith.constant 0 : index
    %231 = vector.load %arg5[%c0_200, %c4_201, %c0_202, %c0_203] : memref<1x8x16x16xf32, #tpu.memory_space<vmem>>, vector<1x1x16x16xf32>
    %232 = vector.shape_cast %231 : vector<1x1x16x16xf32> to vector<1x16x16xf32>
    %c3_204 = arith.constant 3 : index
    %c4_205 = arith.constant 4 : index
    %233 = memref.load %arg1[%c3_204, %c4_205] : memref<8x8xf32, #tpu.memory_space<smem>>
    %234 = vector.broadcast %233 : f32 to vector<1x16x16xf32>
    %235 = arith.mulf %232, %234 : vector<1x16x16xf32>
    %236 = arith.addf %230, %235 : vector<1x16x16xf32>
    %c0_206 = arith.constant 0 : index
    %c5_207 = arith.constant 5 : index
    %c0_208 = arith.constant 0 : index
    %c0_209 = arith.constant 0 : index
    %237 = vector.load %arg5[%c0_206, %c5_207, %c0_208, %c0_209] : memref<1x8x16x16xf32, #tpu.memory_space<vmem>>, vector<1x1x16x16xf32>
    %238 = vector.shape_cast %237 : vector<1x1x16x16xf32> to vector<1x16x16xf32>
    %c3_210 = arith.constant 3 : index
    %c5_211 = arith.constant 5 : index
    %239 = memref.load %arg1[%c3_210, %c5_211] : memref<8x8xf32, #tpu.memory_space<smem>>
    %240 = vector.broadcast %239 : f32 to vector<1x16x16xf32>
    %241 = arith.mulf %238, %240 : vector<1x16x16xf32>
    %242 = arith.addf %236, %241 : vector<1x16x16xf32>
    %c0_212 = arith.constant 0 : index
    %c6_213 = arith.constant 6 : index
    %c0_214 = arith.constant 0 : index
    %c0_215 = arith.constant 0 : index
    %243 = vector.load %arg5[%c0_212, %c6_213, %c0_214, %c0_215] : memref<1x8x16x16xf32, #tpu.memory_space<vmem>>, vector<1x1x16x16xf32>
    %244 = vector.shape_cast %243 : vector<1x1x16x16xf32> to vector<1x16x16xf32>
    %c3_216 = arith.constant 3 : index
    %c6_217 = arith.constant 6 : index
    %245 = memref.load %arg1[%c3_216, %c6_217] : memref<8x8xf32, #tpu.memory_space<smem>>
    %246 = vector.broadcast %245 : f32 to vector<1x16x16xf32>
    %247 = arith.mulf %244, %246 : vector<1x16x16xf32>
    %248 = arith.addf %242, %247 : vector<1x16x16xf32>
    %c0_218 = arith.constant 0 : index
    %c7_219 = arith.constant 7 : index
    %c0_220 = arith.constant 0 : index
    %c0_221 = arith.constant 0 : index
    %249 = vector.load %arg5[%c0_218, %c7_219, %c0_220, %c0_221] : memref<1x8x16x16xf32, #tpu.memory_space<vmem>>, vector<1x1x16x16xf32>
    %250 = vector.shape_cast %249 : vector<1x1x16x16xf32> to vector<1x16x16xf32>
    %c3_222 = arith.constant 3 : index
    %c7_223 = arith.constant 7 : index
    %251 = memref.load %arg1[%c3_222, %c7_223] : memref<8x8xf32, #tpu.memory_space<smem>>
    %252 = vector.broadcast %251 : f32 to vector<1x16x16xf32>
    %253 = arith.mulf %250, %252 : vector<1x16x16xf32>
    %254 = arith.addf %248, %253 : vector<1x16x16xf32>
    %c3_224 = arith.constant 3 : index
    %255 = memref.load %arg2[%c3_224] : memref<8xf32, #tpu.memory_space<smem>>
    %256 = vector.broadcast %255 : f32 to vector<1x16x16xf32>
    %257 = arith.addf %254, %256 : vector<1x16x16xf32>
    %cst_225 = arith.constant 0.000000e+00 : f32
    %cst_226 = arith.constant 1.000000e+00 : f32
    %258 = vector.broadcast %cst_225 : f32 to vector<1x16x16xf32>
    %259 = arith.maximumf %258, %257 : vector<1x16x16xf32>
    %260 = vector.broadcast %cst_226 : f32 to vector<1x16x16xf32>
    %261 = arith.minimumf %260, %259 : vector<1x16x16xf32>
    %c3_227 = arith.constant 3 : index
    %262 = memref.load %arg3[%c3_227] : memref<8xf32, #tpu.memory_space<smem>>
    %c3_228 = arith.constant 3 : index
    %263 = memref.load %arg4[%c3_228] : memref<8xf32, #tpu.memory_space<smem>>
    %264 = vector.broadcast %262 : f32 to vector<1x20x20xf32>
    %265 = vector.broadcast %263 : f32 to vector<1x20x20xf32>
    %266 = arith.select %12, %264, %265 : vector<1x20x20xi1>, vector<1x20x20xf32>
    %c0_229 = arith.constant 0 : index
    %c3_230 = arith.constant 3 : index
    %c0_231 = arith.constant 0 : index
    %c0_232 = arith.constant 0 : index
    %267 = vector.load %arg6[%c0_229, %c3_230, %c0_231, %c0_232] : memref<1x8x20x20xf32, #tpu.memory_space<vmem>>, vector<1x1x20x20xf32>
    %268 = vector.shape_cast %267 : vector<1x1x20x20xf32> to vector<1x20x20xf32>
    %269 = vector.shape_cast %266 : vector<1x20x20xf32> to vector<1x1x20x20xf32>
    tpu.vector_store %arg6[%c0_229, %c3_230, %c0_231, %c0_232], %269 {strides = array<i32>} : memref<1x8x20x20xf32, #tpu.memory_space<vmem>>, vector<1x1x20x20xf32>,
    %c0_233 = arith.constant 0 : index
    %c3_234 = arith.constant 3 : index
    %c2_235 = arith.constant 2 : index
    %c2_236 = arith.constant 2 : index
    %270 = vector.load %arg6[%c0_233, %c3_234, %c2_235, %c2_236] : memref<1x8x20x20xf32, #tpu.memory_space<vmem>>, vector<1x1x16x16xf32>
    %271 = vector.shape_cast %270 : vector<1x1x16x16xf32> to vector<1x16x16xf32>
    %272 = vector.shape_cast %261 : vector<1x16x16xf32> to vector<1x1x16x16xf32>
    tpu.vector_store %arg6[%c0_233, %c3_234, %c2_235, %c2_236], %272 {strides = array<i32>} : memref<1x8x20x20xf32, #tpu.memory_space<vmem>>, vector<1x1x16x16xf32>,
    %c0_237 = arith.constant 0 : index
    %c0_238 = arith.constant 0 : index
    %c0_239 = arith.constant 0 : index
    %c0_240 = arith.constant 0 : index
    %273 = vector.load %arg5[%c0_237, %c0_238, %c0_239, %c0_240] : memref<1x8x16x16xf32, #tpu.memory_space<vmem>>, vector<1x1x16x16xf32>
    %274 = vector.shape_cast %273 : vector<1x1x16x16xf32> to vector<1x16x16xf32>
    %c4_241 = arith.constant 4 : index
    %c0_242 = arith.constant 0 : index
    %275 = memref.load %arg1[%c4_241, %c0_242] : memref<8x8xf32, #tpu.memory_space<smem>>
    %276 = vector.broadcast %275 : f32 to vector<1x16x16xf32>
    %277 = arith.mulf %274, %276 : vector<1x16x16xf32>
    %c0_243 = arith.constant 0 : index
    %c1_244 = arith.constant 1 : index
    %c0_245 = arith.constant 0 : index
    %c0_246 = arith.constant 0 : index
    %278 = vector.load %arg5[%c0_243, %c1_244, %c0_245, %c0_246] : memref<1x8x16x16xf32, #tpu.memory_space<vmem>>, vector<1x1x16x16xf32>
    %279 = vector.shape_cast %278 : vector<1x1x16x16xf32> to vector<1x16x16xf32>
    %c4_247 = arith.constant 4 : index
    %c1_248 = arith.constant 1 : index
    %280 = memref.load %arg1[%c4_247, %c1_248] : memref<8x8xf32, #tpu.memory_space<smem>>
    %281 = vector.broadcast %280 : f32 to vector<1x16x16xf32>
    %282 = arith.mulf %279, %281 : vector<1x16x16xf32>
    %283 = arith.addf %277, %282 : vector<1x16x16xf32>
    %c0_249 = arith.constant 0 : index
    %c2_250 = arith.constant 2 : index
    %c0_251 = arith.constant 0 : index
    %c0_252 = arith.constant 0 : index
    %284 = vector.load %arg5[%c0_249, %c2_250, %c0_251, %c0_252] : memref<1x8x16x16xf32, #tpu.memory_space<vmem>>, vector<1x1x16x16xf32>
    %285 = vector.shape_cast %284 : vector<1x1x16x16xf32> to vector<1x16x16xf32>
    %c4_253 = arith.constant 4 : index
    %c2_254 = arith.constant 2 : index
    %286 = memref.load %arg1[%c4_253, %c2_254] : memref<8x8xf32, #tpu.memory_space<smem>>
    %287 = vector.broadcast %286 : f32 to vector<1x16x16xf32>
    %288 = arith.mulf %285, %287 : vector<1x16x16xf32>
    %289 = arith.addf %283, %288 : vector<1x16x16xf32>
    %c0_255 = arith.constant 0 : index
    %c3_256 = arith.constant 3 : index
    %c0_257 = arith.constant 0 : index
    %c0_258 = arith.constant 0 : index
    %290 = vector.load %arg5[%c0_255, %c3_256, %c0_257, %c0_258] : memref<1x8x16x16xf32, #tpu.memory_space<vmem>>, vector<1x1x16x16xf32>
    %291 = vector.shape_cast %290 : vector<1x1x16x16xf32> to vector<1x16x16xf32>
    %c4_259 = arith.constant 4 : index
    %c3_260 = arith.constant 3 : index
    %292 = memref.load %arg1[%c4_259, %c3_260] : memref<8x8xf32, #tpu.memory_space<smem>>
    %293 = vector.broadcast %292 : f32 to vector<1x16x16xf32>
    %294 = arith.mulf %291, %293 : vector<1x16x16xf32>
    %295 = arith.addf %289, %294 : vector<1x16x16xf32>
    %c0_261 = arith.constant 0 : index
    %c4_262 = arith.constant 4 : index
    %c0_263 = arith.constant 0 : index
    %c0_264 = arith.constant 0 : index
    %296 = vector.load %arg5[%c0_261, %c4_262, %c0_263, %c0_264] : memref<1x8x16x16xf32, #tpu.memory_space<vmem>>, vector<1x1x16x16xf32>
    %297 = vector.shape_cast %296 : vector<1x1x16x16xf32> to vector<1x16x16xf32>
    %c4_265 = arith.constant 4 : index
    %c4_266 = arith.constant 4 : index
    %298 = memref.load %arg1[%c4_265, %c4_266] : memref<8x8xf32, #tpu.memory_space<smem>>
    %299 = vector.broadcast %298 : f32 to vector<1x16x16xf32>
    %300 = arith.mulf %297, %299 : vector<1x16x16xf32>
    %301 = arith.addf %295, %300 : vector<1x16x16xf32>
    %c0_267 = arith.constant 0 : index
    %c5_268 = arith.constant 5 : index
    %c0_269 = arith.constant 0 : index
    %c0_270 = arith.constant 0 : index
    %302 = vector.load %arg5[%c0_267, %c5_268, %c0_269, %c0_270] : memref<1x8x16x16xf32, #tpu.memory_space<vmem>>, vector<1x1x16x16xf32>
    %303 = vector.shape_cast %302 : vector<1x1x16x16xf32> to vector<1x16x16xf32>
    %c4_271 = arith.constant 4 : index
    %c5_272 = arith.constant 5 : index
    %304 = memref.load %arg1[%c4_271, %c5_272] : memref<8x8xf32, #tpu.memory_space<smem>>
    %305 = vector.broadcast %304 : f32 to vector<1x16x16xf32>
    %306 = arith.mulf %303, %305 : vector<1x16x16xf32>
    %307 = arith.addf %301, %306 : vector<1x16x16xf32>
    %c0_273 = arith.constant 0 : index
    %c6_274 = arith.constant 6 : index
    %c0_275 = arith.constant 0 : index
    %c0_276 = arith.constant 0 : index
    %308 = vector.load %arg5[%c0_273, %c6_274, %c0_275, %c0_276] : memref<1x8x16x16xf32, #tpu.memory_space<vmem>>, vector<1x1x16x16xf32>
    %309 = vector.shape_cast %308 : vector<1x1x16x16xf32> to vector<1x16x16xf32>
    %c4_277 = arith.constant 4 : index
    %c6_278 = arith.constant 6 : index
    %310 = memref.load %arg1[%c4_277, %c6_278] : memref<8x8xf32, #tpu.memory_space<smem>>
    %311 = vector.broadcast %310 : f32 to vector<1x16x16xf32>
    %312 = arith.mulf %309, %311 : vector<1x16x16xf32>
    %313 = arith.addf %307, %312 : vector<1x16x16xf32>
    %c0_279 = arith.constant 0 : index
    %c7_280 = arith.constant 7 : index
    %c0_281 = arith.constant 0 : index
    %c0_282 = arith.constant 0 : index
    %314 = vector.load %arg5[%c0_279, %c7_280, %c0_281, %c0_282] : memref<1x8x16x16xf32, #tpu.memory_space<vmem>>, vector<1x1x16x16xf32>
    %315 = vector.shape_cast %314 : vector<1x1x16x16xf32> to vector<1x16x16xf32>
    %c4_283 = arith.constant 4 : index
    %c7_284 = arith.constant 7 : index
    %316 = memref.load %arg1[%c4_283, %c7_284] : memref<8x8xf32, #tpu.memory_space<smem>>
    %317 = vector.broadcast %316 : f32 to vector<1x16x16xf32>
    %318 = arith.mulf %315, %317 : vector<1x16x16xf32>
    %319 = arith.addf %313, %318 : vector<1x16x16xf32>
    %c4_285 = arith.constant 4 : index
    %320 = memref.load %arg2[%c4_285] : memref<8xf32, #tpu.memory_space<smem>>
    %321 = vector.broadcast %320 : f32 to vector<1x16x16xf32>
    %322 = arith.addf %319, %321 : vector<1x16x16xf32>
    %cst_286 = arith.constant 0.000000e+00 : f32
    %cst_287 = arith.constant 1.000000e+00 : f32
    %323 = vector.broadcast %cst_286 : f32 to vector<1x16x16xf32>
    %324 = arith.maximumf %323, %322 : vector<1x16x16xf32>
    %325 = vector.broadcast %cst_287 : f32 to vector<1x16x16xf32>
    %326 = arith.minimumf %325, %324 : vector<1x16x16xf32>
    %c4_288 = arith.constant 4 : index
    %327 = memref.load %arg3[%c4_288] : memref<8xf32, #tpu.memory_space<smem>>
    %c4_289 = arith.constant 4 : index
    %328 = memref.load %arg4[%c4_289] : memref<8xf32, #tpu.memory_space<smem>>
    %329 = vector.broadcast %327 : f32 to vector<1x20x20xf32>
    %330 = vector.broadcast %328 : f32 to vector<1x20x20xf32>
    %331 = arith.select %12, %329, %330 : vector<1x20x20xi1>, vector<1x20x20xf32>
    %c0_290 = arith.constant 0 : index
    %c4_291 = arith.constant 4 : index
    %c0_292 = arith.constant 0 : index
    %c0_293 = arith.constant 0 : index
    %332 = vector.load %arg6[%c0_290, %c4_291, %c0_292, %c0_293] : memref<1x8x20x20xf32, #tpu.memory_space<vmem>>, vector<1x1x20x20xf32>
    %333 = vector.shape_cast %332 : vector<1x1x20x20xf32> to vector<1x20x20xf32>
    %334 = vector.shape_cast %331 : vector<1x20x20xf32> to vector<1x1x20x20xf32>
    tpu.vector_store %arg6[%c0_290, %c4_291, %c0_292, %c0_293], %334 {strides = array<i32>} : memref<1x8x20x20xf32, #tpu.memory_space<vmem>>, vector<1x1x20x20xf32>,
    %c0_294 = arith.constant 0 : index
    %c4_295 = arith.constant 4 : index
    %c2_296 = arith.constant 2 : index
    %c2_297 = arith.constant 2 : index
    %335 = vector.load %arg6[%c0_294, %c4_295, %c2_296, %c2_297] : memref<1x8x20x20xf32, #tpu.memory_space<vmem>>, vector<1x1x16x16xf32>
    %336 = vector.shape_cast %335 : vector<1x1x16x16xf32> to vector<1x16x16xf32>
    %337 = vector.shape_cast %326 : vector<1x16x16xf32> to vector<1x1x16x16xf32>
    tpu.vector_store %arg6[%c0_294, %c4_295, %c2_296, %c2_297], %337 {strides = array<i32>} : memref<1x8x20x20xf32, #tpu.memory_space<vmem>>, vector<1x1x16x16xf32>,
    %c0_298 = arith.constant 0 : index
    %c0_299 = arith.constant 0 : index
    %c0_300 = arith.constant 0 : index
    %c0_301 = arith.constant 0 : index
    %338 = vector.load %arg5[%c0_298, %c0_299, %c0_300, %c0_301] : memref<1x8x16x16xf32, #tpu.memory_space<vmem>>, vector<1x1x16x16xf32>
    %339 = vector.shape_cast %338 : vector<1x1x16x16xf32> to vector<1x16x16xf32>
    %c5_302 = arith.constant 5 : index
    %c0_303 = arith.constant 0 : index
    %340 = memref.load %arg1[%c5_302, %c0_303] : memref<8x8xf32, #tpu.memory_space<smem>>
    %341 = vector.broadcast %340 : f32 to vector<1x16x16xf32>
    %342 = arith.mulf %339, %341 : vector<1x16x16xf32>
    %c0_304 = arith.constant 0 : index
    %c1_305 = arith.constant 1 : index
    %c0_306 = arith.constant 0 : index
    %c0_307 = arith.constant 0 : index
    %343 = vector.load %arg5[%c0_304, %c1_305, %c0_306, %c0_307] : memref<1x8x16x16xf32, #tpu.memory_space<vmem>>, vector<1x1x16x16xf32>
    %344 = vector.shape_cast %343 : vector<1x1x16x16xf32> to vector<1x16x16xf32>
    %c5_308 = arith.constant 5 : index
    %c1_309 = arith.constant 1 : index
    %345 = memref.load %arg1[%c5_308, %c1_309] : memref<8x8xf32, #tpu.memory_space<smem>>
    %346 = vector.broadcast %345 : f32 to vector<1x16x16xf32>
    %347 = arith.mulf %344, %346 : vector<1x16x16xf32>
    %348 = arith.addf %342, %347 : vector<1x16x16xf32>
    %c0_310 = arith.constant 0 : index
    %c2_311 = arith.constant 2 : index
    %c0_312 = arith.constant 0 : index
    %c0_313 = arith.constant 0 : index
    %349 = vector.load %arg5[%c0_310, %c2_311, %c0_312, %c0_313] : memref<1x8x16x16xf32, #tpu.memory_space<vmem>>, vector<1x1x16x16xf32>
    %350 = vector.shape_cast %349 : vector<1x1x16x16xf32> to vector<1x16x16xf32>
    %c5_314 = arith.constant 5 : index
    %c2_315 = arith.constant 2 : index
    %351 = memref.load %arg1[%c5_314, %c2_315] : memref<8x8xf32, #tpu.memory_space<smem>>
    %352 = vector.broadcast %351 : f32 to vector<1x16x16xf32>
    %353 = arith.mulf %350, %352 : vector<1x16x16xf32>
    %354 = arith.addf %348, %353 : vector<1x16x16xf32>
    %c0_316 = arith.constant 0 : index
    %c3_317 = arith.constant 3 : index
    %c0_318 = arith.constant 0 : index
    %c0_319 = arith.constant 0 : index
    %355 = vector.load %arg5[%c0_316, %c3_317, %c0_318, %c0_319] : memref<1x8x16x16xf32, #tpu.memory_space<vmem>>, vector<1x1x16x16xf32>
    %356 = vector.shape_cast %355 : vector<1x1x16x16xf32> to vector<1x16x16xf32>
    %c5_320 = arith.constant 5 : index
    %c3_321 = arith.constant 3 : index
    %357 = memref.load %arg1[%c5_320, %c3_321] : memref<8x8xf32, #tpu.memory_space<smem>>
    %358 = vector.broadcast %357 : f32 to vector<1x16x16xf32>
    %359 = arith.mulf %356, %358 : vector<1x16x16xf32>
    %360 = arith.addf %354, %359 : vector<1x16x16xf32>
    %c0_322 = arith.constant 0 : index
    %c4_323 = arith.constant 4 : index
    %c0_324 = arith.constant 0 : index
    %c0_325 = arith.constant 0 : index
    %361 = vector.load %arg5[%c0_322, %c4_323, %c0_324, %c0_325] : memref<1x8x16x16xf32, #tpu.memory_space<vmem>>, vector<1x1x16x16xf32>
    %362 = vector.shape_cast %361 : vector<1x1x16x16xf32> to vector<1x16x16xf32>
    %c5_326 = arith.constant 5 : index
    %c4_327 = arith.constant 4 : index
    %363 = memref.load %arg1[%c5_326, %c4_327] : memref<8x8xf32, #tpu.memory_space<smem>>
    %364 = vector.broadcast %363 : f32 to vector<1x16x16xf32>
    %365 = arith.mulf %362, %364 : vector<1x16x16xf32>
    %366 = arith.addf %360, %365 : vector<1x16x16xf32>
    %c0_328 = arith.constant 0 : index
    %c5_329 = arith.constant 5 : index
    %c0_330 = arith.constant 0 : index
    %c0_331 = arith.constant 0 : index
    %367 = vector.load %arg5[%c0_328, %c5_329, %c0_330, %c0_331] : memref<1x8x16x16xf32, #tpu.memory_space<vmem>>, vector<1x1x16x16xf32>
    %368 = vector.shape_cast %367 : vector<1x1x16x16xf32> to vector<1x16x16xf32>
    %c5_332 = arith.constant 5 : index
    %c5_333 = arith.constant 5 : index
    %369 = memref.load %arg1[%c5_332, %c5_333] : memref<8x8xf32, #tpu.memory_space<smem>>
    %370 = vector.broadcast %369 : f32 to vector<1x16x16xf32>
    %371 = arith.mulf %368, %370 : vector<1x16x16xf32>
    %372 = arith.addf %366, %371 : vector<1x16x16xf32>
    %c0_334 = arith.constant 0 : index
    %c6_335 = arith.constant 6 : index
    %c0_336 = arith.constant 0 : index
    %c0_337 = arith.constant 0 : index
    %373 = vector.load %arg5[%c0_334, %c6_335, %c0_336, %c0_337] : memref<1x8x16x16xf32, #tpu.memory_space<vmem>>, vector<1x1x16x16xf32>
    %374 = vector.shape_cast %373 : vector<1x1x16x16xf32> to vector<1x16x16xf32>
    %c5_338 = arith.constant 5 : index
    %c6_339 = arith.constant 6 : index
    %375 = memref.load %arg1[%c5_338, %c6_339] : memref<8x8xf32, #tpu.memory_space<smem>>
    %376 = vector.broadcast %375 : f32 to vector<1x16x16xf32>
    %377 = arith.mulf %374, %376 : vector<1x16x16xf32>
    %378 = arith.addf %372, %377 : vector<1x16x16xf32>
    %c0_340 = arith.constant 0 : index
    %c7_341 = arith.constant 7 : index
    %c0_342 = arith.constant 0 : index
    %c0_343 = arith.constant 0 : index
    %379 = vector.load %arg5[%c0_340, %c7_341, %c0_342, %c0_343] : memref<1x8x16x16xf32, #tpu.memory_space<vmem>>, vector<1x1x16x16xf32>
    %380 = vector.shape_cast %379 : vector<1x1x16x16xf32> to vector<1x16x16xf32>
    %c5_344 = arith.constant 5 : index
    %c7_345 = arith.constant 7 : index
    %381 = memref.load %arg1[%c5_344, %c7_345] : memref<8x8xf32, #tpu.memory_space<smem>>
    %382 = vector.broadcast %381 : f32 to vector<1x16x16xf32>
    %383 = arith.mulf %380, %382 : vector<1x16x16xf32>
    %384 = arith.addf %378, %383 : vector<1x16x16xf32>
    %c5_346 = arith.constant 5 : index
    %385 = memref.load %arg2[%c5_346] : memref<8xf32, #tpu.memory_space<smem>>
    %386 = vector.broadcast %385 : f32 to vector<1x16x16xf32>
    %387 = arith.addf %384, %386 : vector<1x16x16xf32>
    %cst_347 = arith.constant 0.000000e+00 : f32
    %cst_348 = arith.constant 1.000000e+00 : f32
    %388 = vector.broadcast %cst_347 : f32 to vector<1x16x16xf32>
    %389 = arith.maximumf %388, %387 : vector<1x16x16xf32>
    %390 = vector.broadcast %cst_348 : f32 to vector<1x16x16xf32>
    %391 = arith.minimumf %390, %389 : vector<1x16x16xf32>
    %c5_349 = arith.constant 5 : index
    %392 = memref.load %arg3[%c5_349] : memref<8xf32, #tpu.memory_space<smem>>
    %c5_350 = arith.constant 5 : index
    %393 = memref.load %arg4[%c5_350] : memref<8xf32, #tpu.memory_space<smem>>
    %394 = vector.broadcast %392 : f32 to vector<1x20x20xf32>
    %395 = vector.broadcast %393 : f32 to vector<1x20x20xf32>
    %396 = arith.select %12, %394, %395 : vector<1x20x20xi1>, vector<1x20x20xf32>
    %c0_351 = arith.constant 0 : index
    %c5_352 = arith.constant 5 : index
    %c0_353 = arith.constant 0 : index
    %c0_354 = arith.constant 0 : index
    %397 = vector.load %arg6[%c0_351, %c5_352, %c0_353, %c0_354] : memref<1x8x20x20xf32, #tpu.memory_space<vmem>>, vector<1x1x20x20xf32>
    %398 = vector.shape_cast %397 : vector<1x1x20x20xf32> to vector<1x20x20xf32>
    %399 = vector.shape_cast %396 : vector<1x20x20xf32> to vector<1x1x20x20xf32>
    tpu.vector_store %arg6[%c0_351, %c5_352, %c0_353, %c0_354], %399 {strides = array<i32>} : memref<1x8x20x20xf32, #tpu.memory_space<vmem>>, vector<1x1x20x20xf32>,
    %c0_355 = arith.constant 0 : index
    %c5_356 = arith.constant 5 : index
    %c2_357 = arith.constant 2 : index
    %c2_358 = arith.constant 2 : index
    %400 = vector.load %arg6[%c0_355, %c5_356, %c2_357, %c2_358] : memref<1x8x20x20xf32, #tpu.memory_space<vmem>>, vector<1x1x16x16xf32>
    %401 = vector.shape_cast %400 : vector<1x1x16x16xf32> to vector<1x16x16xf32>
    %402 = vector.shape_cast %391 : vector<1x16x16xf32> to vector<1x1x16x16xf32>
    tpu.vector_store %arg6[%c0_355, %c5_356, %c2_357, %c2_358], %402 {strides = array<i32>} : memref<1x8x20x20xf32, #tpu.memory_space<vmem>>, vector<1x1x16x16xf32>,
    %c0_359 = arith.constant 0 : index
    %c0_360 = arith.constant 0 : index
    %c0_361 = arith.constant 0 : index
    %c0_362 = arith.constant 0 : index
    %403 = vector.load %arg5[%c0_359, %c0_360, %c0_361, %c0_362] : memref<1x8x16x16xf32, #tpu.memory_space<vmem>>, vector<1x1x16x16xf32>
    %404 = vector.shape_cast %403 : vector<1x1x16x16xf32> to vector<1x16x16xf32>
    %c6_363 = arith.constant 6 : index
    %c0_364 = arith.constant 0 : index
    %405 = memref.load %arg1[%c6_363, %c0_364] : memref<8x8xf32, #tpu.memory_space<smem>>
    %406 = vector.broadcast %405 : f32 to vector<1x16x16xf32>
    %407 = arith.mulf %404, %406 : vector<1x16x16xf32>
    %c0_365 = arith.constant 0 : index
    %c1_366 = arith.constant 1 : index
    %c0_367 = arith.constant 0 : index
    %c0_368 = arith.constant 0 : index
    %408 = vector.load %arg5[%c0_365, %c1_366, %c0_367, %c0_368] : memref<1x8x16x16xf32, #tpu.memory_space<vmem>>, vector<1x1x16x16xf32>
    %409 = vector.shape_cast %408 : vector<1x1x16x16xf32> to vector<1x16x16xf32>
    %c6_369 = arith.constant 6 : index
    %c1_370 = arith.constant 1 : index
    %410 = memref.load %arg1[%c6_369, %c1_370] : memref<8x8xf32, #tpu.memory_space<smem>>
    %411 = vector.broadcast %410 : f32 to vector<1x16x16xf32>
    %412 = arith.mulf %409, %411 : vector<1x16x16xf32>
    %413 = arith.addf %407, %412 : vector<1x16x16xf32>
    %c0_371 = arith.constant 0 : index
    %c2_372 = arith.constant 2 : index
    %c0_373 = arith.constant 0 : index
    %c0_374 = arith.constant 0 : index
    %414 = vector.load %arg5[%c0_371, %c2_372, %c0_373, %c0_374] : memref<1x8x16x16xf32, #tpu.memory_space<vmem>>, vector<1x1x16x16xf32>
    %415 = vector.shape_cast %414 : vector<1x1x16x16xf32> to vector<1x16x16xf32>
    %c6_375 = arith.constant 6 : index
    %c2_376 = arith.constant 2 : index
    %416 = memref.load %arg1[%c6_375, %c2_376] : memref<8x8xf32, #tpu.memory_space<smem>>
    %417 = vector.broadcast %416 : f32 to vector<1x16x16xf32>
    %418 = arith.mulf %415, %417 : vector<1x16x16xf32>
    %419 = arith.addf %413, %418 : vector<1x16x16xf32>
    %c0_377 = arith.constant 0 : index
    %c3_378 = arith.constant 3 : index
    %c0_379 = arith.constant 0 : index
    %c0_380 = arith.constant 0 : index
    %420 = vector.load %arg5[%c0_377, %c3_378, %c0_379, %c0_380] : memref<1x8x16x16xf32, #tpu.memory_space<vmem>>, vector<1x1x16x16xf32>
    %421 = vector.shape_cast %420 : vector<1x1x16x16xf32> to vector<1x16x16xf32>
    %c6_381 = arith.constant 6 : index
    %c3_382 = arith.constant 3 : index
    %422 = memref.load %arg1[%c6_381, %c3_382] : memref<8x8xf32, #tpu.memory_space<smem>>
    %423 = vector.broadcast %422 : f32 to vector<1x16x16xf32>
    %424 = arith.mulf %421, %423 : vector<1x16x16xf32>
    %425 = arith.addf %419, %424 : vector<1x16x16xf32>
    %c0_383 = arith.constant 0 : index
    %c4_384 = arith.constant 4 : index
    %c0_385 = arith.constant 0 : index
    %c0_386 = arith.constant 0 : index
    %426 = vector.load %arg5[%c0_383, %c4_384, %c0_385, %c0_386] : memref<1x8x16x16xf32, #tpu.memory_space<vmem>>, vector<1x1x16x16xf32>
    %427 = vector.shape_cast %426 : vector<1x1x16x16xf32> to vector<1x16x16xf32>
    %c6_387 = arith.constant 6 : index
    %c4_388 = arith.constant 4 : index
    %428 = memref.load %arg1[%c6_387, %c4_388] : memref<8x8xf32, #tpu.memory_space<smem>>
    %429 = vector.broadcast %428 : f32 to vector<1x16x16xf32>
    %430 = arith.mulf %427, %429 : vector<1x16x16xf32>
    %431 = arith.addf %425, %430 : vector<1x16x16xf32>
    %c0_389 = arith.constant 0 : index
    %c5_390 = arith.constant 5 : index
    %c0_391 = arith.constant 0 : index
    %c0_392 = arith.constant 0 : index
    %432 = vector.load %arg5[%c0_389, %c5_390, %c0_391, %c0_392] : memref<1x8x16x16xf32, #tpu.memory_space<vmem>>, vector<1x1x16x16xf32>
    %433 = vector.shape_cast %432 : vector<1x1x16x16xf32> to vector<1x16x16xf32>
    %c6_393 = arith.constant 6 : index
    %c5_394 = arith.constant 5 : index
    %434 = memref.load %arg1[%c6_393, %c5_394] : memref<8x8xf32, #tpu.memory_space<smem>>
    %435 = vector.broadcast %434 : f32 to vector<1x16x16xf32>
    %436 = arith.mulf %433, %435 : vector<1x16x16xf32>
    %437 = arith.addf %431, %436 : vector<1x16x16xf32>
    %c0_395 = arith.constant 0 : index
    %c6_396 = arith.constant 6 : index
    %c0_397 = arith.constant 0 : index
    %c0_398 = arith.constant 0 : index
    %438 = vector.load %arg5[%c0_395, %c6_396, %c0_397, %c0_398] : memref<1x8x16x16xf32, #tpu.memory_space<vmem>>, vector<1x1x16x16xf32>
    %439 = vector.shape_cast %438 : vector<1x1x16x16xf32> to vector<1x16x16xf32>
    %c6_399 = arith.constant 6 : index
    %c6_400 = arith.constant 6 : index
    %440 = memref.load %arg1[%c6_399, %c6_400] : memref<8x8xf32, #tpu.memory_space<smem>>
    %441 = vector.broadcast %440 : f32 to vector<1x16x16xf32>
    %442 = arith.mulf %439, %441 : vector<1x16x16xf32>
    %443 = arith.addf %437, %442 : vector<1x16x16xf32>
    %c0_401 = arith.constant 0 : index
    %c7_402 = arith.constant 7 : index
    %c0_403 = arith.constant 0 : index
    %c0_404 = arith.constant 0 : index
    %444 = vector.load %arg5[%c0_401, %c7_402, %c0_403, %c0_404] : memref<1x8x16x16xf32, #tpu.memory_space<vmem>>, vector<1x1x16x16xf32>
    %445 = vector.shape_cast %444 : vector<1x1x16x16xf32> to vector<1x16x16xf32>
    %c6_405 = arith.constant 6 : index
    %c7_406 = arith.constant 7 : index
    %446 = memref.load %arg1[%c6_405, %c7_406] : memref<8x8xf32, #tpu.memory_space<smem>>
    %447 = vector.broadcast %446 : f32 to vector<1x16x16xf32>
    %448 = arith.mulf %445, %447 : vector<1x16x16xf32>
    %449 = arith.addf %443, %448 : vector<1x16x16xf32>
    %c6_407 = arith.constant 6 : index
    %450 = memref.load %arg2[%c6_407] : memref<8xf32, #tpu.memory_space<smem>>
    %451 = vector.broadcast %450 : f32 to vector<1x16x16xf32>
    %452 = arith.addf %449, %451 : vector<1x16x16xf32>
    %cst_408 = arith.constant 0.000000e+00 : f32
    %cst_409 = arith.constant 1.000000e+00 : f32
    %453 = vector.broadcast %cst_408 : f32 to vector<1x16x16xf32>
    %454 = arith.maximumf %453, %452 : vector<1x16x16xf32>
    %455 = vector.broadcast %cst_409 : f32 to vector<1x16x16xf32>
    %456 = arith.minimumf %455, %454 : vector<1x16x16xf32>
    %c6_410 = arith.constant 6 : index
    %457 = memref.load %arg3[%c6_410] : memref<8xf32, #tpu.memory_space<smem>>
    %c6_411 = arith.constant 6 : index
    %458 = memref.load %arg4[%c6_411] : memref<8xf32, #tpu.memory_space<smem>>
    %459 = vector.broadcast %457 : f32 to vector<1x20x20xf32>
    %460 = vector.broadcast %458 : f32 to vector<1x20x20xf32>
    %461 = arith.select %12, %459, %460 : vector<1x20x20xi1>, vector<1x20x20xf32>
    %c0_412 = arith.constant 0 : index
    %c6_413 = arith.constant 6 : index
    %c0_414 = arith.constant 0 : index
    %c0_415 = arith.constant 0 : index
    %462 = vector.load %arg6[%c0_412, %c6_413, %c0_414, %c0_415] : memref<1x8x20x20xf32, #tpu.memory_space<vmem>>, vector<1x1x20x20xf32>
    %463 = vector.shape_cast %462 : vector<1x1x20x20xf32> to vector<1x20x20xf32>
    %464 = vector.shape_cast %461 : vector<1x20x20xf32> to vector<1x1x20x20xf32>
    tpu.vector_store %arg6[%c0_412, %c6_413, %c0_414, %c0_415], %464 {strides = array<i32>} : memref<1x8x20x20xf32, #tpu.memory_space<vmem>>, vector<1x1x20x20xf32>,
    %c0_416 = arith.constant 0 : index
    %c6_417 = arith.constant 6 : index
    %c2_418 = arith.constant 2 : index
    %c2_419 = arith.constant 2 : index
    %465 = vector.load %arg6[%c0_416, %c6_417, %c2_418, %c2_419] : memref<1x8x20x20xf32, #tpu.memory_space<vmem>>, vector<1x1x16x16xf32>
    %466 = vector.shape_cast %465 : vector<1x1x16x16xf32> to vector<1x16x16xf32>
    %467 = vector.shape_cast %456 : vector<1x16x16xf32> to vector<1x1x16x16xf32>
    tpu.vector_store %arg6[%c0_416, %c6_417, %c2_418, %c2_419], %467 {strides = array<i32>} : memref<1x8x20x20xf32, #tpu.memory_space<vmem>>, vector<1x1x16x16xf32>,
    %c0_420 = arith.constant 0 : index
    %c0_421 = arith.constant 0 : index
    %c0_422 = arith.constant 0 : index
    %c0_423 = arith.constant 0 : index
    %468 = vector.load %arg5[%c0_420, %c0_421, %c0_422, %c0_423] : memref<1x8x16x16xf32, #tpu.memory_space<vmem>>, vector<1x1x16x16xf32>
    %469 = vector.shape_cast %468 : vector<1x1x16x16xf32> to vector<1x16x16xf32>
    %c7_424 = arith.constant 7 : index
    %c0_425 = arith.constant 0 : index
    %470 = memref.load %arg1[%c7_424, %c0_425] : memref<8x8xf32, #tpu.memory_space<smem>>
    %471 = vector.broadcast %470 : f32 to vector<1x16x16xf32>
    %472 = arith.mulf %469, %471 : vector<1x16x16xf32>
    %c0_426 = arith.constant 0 : index
    %c1_427 = arith.constant 1 : index
    %c0_428 = arith.constant 0 : index
    %c0_429 = arith.constant 0 : index
    %473 = vector.load %arg5[%c0_426, %c1_427, %c0_428, %c0_429] : memref<1x8x16x16xf32, #tpu.memory_space<vmem>>, vector<1x1x16x16xf32>
    %474 = vector.shape_cast %473 : vector<1x1x16x16xf32> to vector<1x16x16xf32>
    %c7_430 = arith.constant 7 : index
    %c1_431 = arith.constant 1 : index
    %475 = memref.load %arg1[%c7_430, %c1_431] : memref<8x8xf32, #tpu.memory_space<smem>>
    %476 = vector.broadcast %475 : f32 to vector<1x16x16xf32>
    %477 = arith.mulf %474, %476 : vector<1x16x16xf32>
    %478 = arith.addf %472, %477 : vector<1x16x16xf32>
    %c0_432 = arith.constant 0 : index
    %c2_433 = arith.constant 2 : index
    %c0_434 = arith.constant 0 : index
    %c0_435 = arith.constant 0 : index
    %479 = vector.load %arg5[%c0_432, %c2_433, %c0_434, %c0_435] : memref<1x8x16x16xf32, #tpu.memory_space<vmem>>, vector<1x1x16x16xf32>
    %480 = vector.shape_cast %479 : vector<1x1x16x16xf32> to vector<1x16x16xf32>
    %c7_436 = arith.constant 7 : index
    %c2_437 = arith.constant 2 : index
    %481 = memref.load %arg1[%c7_436, %c2_437] : memref<8x8xf32, #tpu.memory_space<smem>>
    %482 = vector.broadcast %481 : f32 to vector<1x16x16xf32>
    %483 = arith.mulf %480, %482 : vector<1x16x16xf32>
    %484 = arith.addf %478, %483 : vector<1x16x16xf32>
    %c0_438 = arith.constant 0 : index
    %c3_439 = arith.constant 3 : index
    %c0_440 = arith.constant 0 : index
    %c0_441 = arith.constant 0 : index
    %485 = vector.load %arg5[%c0_438, %c3_439, %c0_440, %c0_441] : memref<1x8x16x16xf32, #tpu.memory_space<vmem>>, vector<1x1x16x16xf32>
    %486 = vector.shape_cast %485 : vector<1x1x16x16xf32> to vector<1x16x16xf32>
    %c7_442 = arith.constant 7 : index
    %c3_443 = arith.constant 3 : index
    %487 = memref.load %arg1[%c7_442, %c3_443] : memref<8x8xf32, #tpu.memory_space<smem>>
    %488 = vector.broadcast %487 : f32 to vector<1x16x16xf32>
    %489 = arith.mulf %486, %488 : vector<1x16x16xf32>
    %490 = arith.addf %484, %489 : vector<1x16x16xf32>
    %c0_444 = arith.constant 0 : index
    %c4_445 = arith.constant 4 : index
    %c0_446 = arith.constant 0 : index
    %c0_447 = arith.constant 0 : index
    %491 = vector.load %arg5[%c0_444, %c4_445, %c0_446, %c0_447] : memref<1x8x16x16xf32, #tpu.memory_space<vmem>>, vector<1x1x16x16xf32>
    %492 = vector.shape_cast %491 : vector<1x1x16x16xf32> to vector<1x16x16xf32>
    %c7_448 = arith.constant 7 : index
    %c4_449 = arith.constant 4 : index
    %493 = memref.load %arg1[%c7_448, %c4_449] : memref<8x8xf32, #tpu.memory_space<smem>>
    %494 = vector.broadcast %493 : f32 to vector<1x16x16xf32>
    %495 = arith.mulf %492, %494 : vector<1x16x16xf32>
    %496 = arith.addf %490, %495 : vector<1x16x16xf32>
    %c0_450 = arith.constant 0 : index
    %c5_451 = arith.constant 5 : index
    %c0_452 = arith.constant 0 : index
    %c0_453 = arith.constant 0 : index
    %497 = vector.load %arg5[%c0_450, %c5_451, %c0_452, %c0_453] : memref<1x8x16x16xf32, #tpu.memory_space<vmem>>, vector<1x1x16x16xf32>
    %498 = vector.shape_cast %497 : vector<1x1x16x16xf32> to vector<1x16x16xf32>
    %c7_454 = arith.constant 7 : index
    %c5_455 = arith.constant 5 : index
    %499 = memref.load %arg1[%c7_454, %c5_455] : memref<8x8xf32, #tpu.memory_space<smem>>
    %500 = vector.broadcast %499 : f32 to vector<1x16x16xf32>
    %501 = arith.mulf %498, %500 : vector<1x16x16xf32>
    %502 = arith.addf %496, %501 : vector<1x16x16xf32>
    %c0_456 = arith.constant 0 : index
    %c6_457 = arith.constant 6 : index
    %c0_458 = arith.constant 0 : index
    %c0_459 = arith.constant 0 : index
    %503 = vector.load %arg5[%c0_456, %c6_457, %c0_458, %c0_459] : memref<1x8x16x16xf32, #tpu.memory_space<vmem>>, vector<1x1x16x16xf32>
    %504 = vector.shape_cast %503 : vector<1x1x16x16xf32> to vector<1x16x16xf32>
    %c7_460 = arith.constant 7 : index
    %c6_461 = arith.constant 6 : index
    %505 = memref.load %arg1[%c7_460, %c6_461] : memref<8x8xf32, #tpu.memory_space<smem>>
    %506 = vector.broadcast %505 : f32 to vector<1x16x16xf32>
    %507 = arith.mulf %504, %506 : vector<1x16x16xf32>
    %508 = arith.addf %502, %507 : vector<1x16x16xf32>
    %c0_462 = arith.constant 0 : index
    %c7_463 = arith.constant 7 : index
    %c0_464 = arith.constant 0 : index
    %c0_465 = arith.constant 0 : index
    %509 = vector.load %arg5[%c0_462, %c7_463, %c0_464, %c0_465] : memref<1x8x16x16xf32, #tpu.memory_space<vmem>>, vector<1x1x16x16xf32>
    %510 = vector.shape_cast %509 : vector<1x1x16x16xf32> to vector<1x16x16xf32>
    %c7_466 = arith.constant 7 : index
    %c7_467 = arith.constant 7 : index
    %511 = memref.load %arg1[%c7_466, %c7_467] : memref<8x8xf32, #tpu.memory_space<smem>>
    %512 = vector.broadcast %511 : f32 to vector<1x16x16xf32>
    %513 = arith.mulf %510, %512 : vector<1x16x16xf32>
    %514 = arith.addf %508, %513 : vector<1x16x16xf32>
    %c7_468 = arith.constant 7 : index
    %515 = memref.load %arg2[%c7_468] : memref<8xf32, #tpu.memory_space<smem>>
    %516 = vector.broadcast %515 : f32 to vector<1x16x16xf32>
    %517 = arith.addf %514, %516 : vector<1x16x16xf32>
    %cst_469 = arith.constant 0.000000e+00 : f32
    %cst_470 = arith.constant 1.000000e+00 : f32
    %518 = vector.broadcast %cst_469 : f32 to vector<1x16x16xf32>
    %519 = arith.maximumf %518, %517 : vector<1x16x16xf32>
    %520 = vector.broadcast %cst_470 : f32 to vector<1x16x16xf32>
    %521 = arith.minimumf %520, %519 : vector<1x16x16xf32>
    %c7_471 = arith.constant 7 : index
    %522 = memref.load %arg3[%c7_471] : memref<8xf32, #tpu.memory_space<smem>>
    %c7_472 = arith.constant 7 : index
    %523 = memref.load %arg4[%c7_472] : memref<8xf32, #tpu.memory_space<smem>>
    %524 = vector.broadcast %522 : f32 to vector<1x20x20xf32>
    %525 = vector.broadcast %523 : f32 to vector<1x20x20xf32>
    %526 = arith.select %12, %524, %525 : vector<1x20x20xi1>, vector<1x20x20xf32>
    %c0_473 = arith.constant 0 : index
    %c7_474 = arith.constant 7 : index
    %c0_475 = arith.constant 0 : index
    %c0_476 = arith.constant 0 : index
    %527 = vector.load %arg6[%c0_473, %c7_474, %c0_475, %c0_476] : memref<1x8x20x20xf32, #tpu.memory_space<vmem>>, vector<1x1x20x20xf32>
    %528 = vector.shape_cast %527 : vector<1x1x20x20xf32> to vector<1x20x20xf32>
    %529 = vector.shape_cast %526 : vector<1x20x20xf32> to vector<1x1x20x20xf32>
    tpu.vector_store %arg6[%c0_473, %c7_474, %c0_475, %c0_476], %529 {strides = array<i32>} : memref<1x8x20x20xf32, #tpu.memory_space<vmem>>, vector<1x1x20x20xf32>,
    %c0_477 = arith.constant 0 : index
    %c7_478 = arith.constant 7 : index
    %c2_479 = arith.constant 2 : index
    %c2_480 = arith.constant 2 : index
    %530 = vector.load %arg6[%c0_477, %c7_478, %c2_479, %c2_480] : memref<1x8x20x20xf32, #tpu.memory_space<vmem>>, vector<1x1x16x16xf32>
    %531 = vector.shape_cast %530 : vector<1x1x16x16xf32> to vector<1x16x16xf32>
    %532 = vector.shape_cast %521 : vector<1x16x16xf32> to vector<1x1x16x16xf32>
    tpu.vector_store %arg6[%c0_477, %c7_478, %c2_479, %c2_480], %532 {strides = array<i32>} : memref<1x8x20x20xf32, #tpu.memory_space<vmem>>, vector<1x1x16x16xf32>,
    return
  }
  func.func @transform_0(%arg0: i32) -> (i32, i32) {
    %c0_i32 = arith.constant 0 : i32
    %c0_i32_0 = arith.constant 0 : i32
    %c0_i32_1 = arith.constant 0 : i32
    return %c0_i32, %c0_i32_0 : i32, i32
  }
  func.func @transform_1(%arg0: i32) -> i32 {
    %c0_i32 = arith.constant 0 : i32
    %c0_i32_0 = arith.constant 0 : i32
    return %c0_i32 : i32
  }
  func.func @transform_2(%arg0: i32) -> i32 {
    %c0_i32 = arith.constant 0 : i32
    %c0_i32_0 = arith.constant 0 : i32
    return %c0_i32 : i32
  }
  func.func @transform_3(%arg0: i32) -> i32 {
    %c0_i32 = arith.constant 0 : i32
    %c0_i32_0 = arith.constant 0 : i32
    return %c0_i32 : i32
  }
  func.func @transform_4(%arg0: i32) -> (i32, i32, i32, i32) {
    %c0_i32 = arith.constant 0 : i32
    %c0_i32_0 = arith.constant 0 : i32
    %c0_i32_1 = arith.constant 0 : i32
    %c0_i32_2 = arith.constant 0 : i32
    return %arg0, %c0_i32, %c0_i32_0, %c0_i32_1 : i32, i32, i32, i32
  }
  func.func @transform_5(%arg0: i32) -> (i32, i32, i32, i32) {
    %c0_i32 = arith.constant 0 : i32
    %c0_i32_0 = arith.constant 0 : i32
    %c0_i32_1 = arith.constant 0 : i32
    %c0_i32_2 = arith.constant 0 : i32
    return %arg0, %c0_i32, %c0_i32_0, %c0_i32_1 : i32, i32, i32, i32
  }
}

</mosaic_0001>

<llo_original>
// kernel: model_forward.1
$region0: #{model_forward.1}
  #allocation0 [shape = 'u32[]', space=smem, size = 0x4, offset = 0x4, fixed_abs, tag = 'smem constant byte address 0x4 - core index']
  #allocation1 [shape = 'u32[144,128]{1,0:T(1,128)}', space=vmem, size = 0x12000, scoped, tag = 'internal scratch']
  %s0 = inlined_call_operand.vmem [shape: f32[8,8], index: 0, kind: input, shape index: {}]
  %s1 = inlined_call_operand.vmem [shape: f32[8], index: 1, kind: input, shape index: {}]
  %s2 = inlined_call_operand.vmem [shape: f32[8], index: 2, kind: input, shape index: {}]
  %s3 = inlined_call_operand.vmem [shape: f32[8], index: 3, kind: input, shape index: {}]
  %s4 = inlined_call_operand.hbm [shape: f32[2,8,16,16], index: 4, kind: input, shape index: {}]
  %s5 = inlined_call_operand.vmem [shape: f32[2,8,20,20], index: 5, kind: output, shape index: {}]
  %s6 = sld [smem:[#allocation0]]
  $region73: #{model_forward.1} parent=0
    _
  %s8 = ssub.s32 1, %s6
  %s9 = scalar_select 0, %s8, %s6
  $region1: #{model_forward.1} parent=0
    #allocation2 [shape = 'u8[4096]{0}', space=smem, size = 0x1000, scoped, tag = 'input window, operand 0, single buffered']
    #allocation3 [shape = 's32[2]{0}', space=sflag, size = 0x8, scoped, tag = 'scoped memory for model_forward.1']
    #allocation4 [shape = 's32[2]{0}', space=sflag, size = 0x8, scoped, tag = 'scoped memory for model_forward.1']
    #allocation5 [shape = 'u8[512]{0}', space=smem, size = 0x200, scoped, tag = 'input window, operand 1, single buffered']
    #allocation6 [shape = 's32[1]{0}', space=sflag, size = 0x4, scoped, tag = 'scoped memory for model_forward.1']
    #allocation7 [shape = 'u8[512]{0}', space=smem, size = 0x200, scoped, tag = 'input window, operand 2, single buffered']
    #allocation8 [shape = 'u8[512]{0}', space=smem, size = 0x200, scoped, tag = 'input window, operand 3, single buffered']
    #allocation9 [shape = 's32[1]{0}', space=sflag, size = 0x4, scoped, tag = 'scoped memory for model_forward.1']
    #allocation10 [shape = 'u8[131072]{0}', space=vmem, size = 0x20000, scoped, tag = 'input window, operand 4']
    %10 = vsyncpa [#allocation4], 0
    %11 = vsyncpa [#allocation6], 0
    %12 = vsyncpa [#allocation9], 0
    %13 = vsyncpa [#allocation3], 0
    %s14 = scalar_lea.sflag [#allocation3], 1
    %15 = vsyncpa %s14, 0
    loop: start=0, step=1, limit=4
    $region2: #{model_forward.1} parent=1 // loop_pre_header
      _
    $region3: #{model_forward.1} parent=1 // loop_header
      %s17 = sphi 0, %s21
      %p18 = scmp.ge.s32.totalorder %s17, 4
      %s25 = sphi 0, %s25
      %s27 = sphi 0, %s25
      %s28 = sphi 0, %s27
      %s42 = sphi 0, %s28
      %s46 = sphi 0, %s46
      %s48 = sphi 0, %s46
      %s49 = sphi 0, %s48
      %s63 = sphi 0, %s49
      %s67 = sphi 0, %s67
      %s69 = sphi 0, %s67
      %s70 = sphi 0, %s69
      %s84 = sphi 0, %s70
      %s88 = sphi 0, %s88
      %s90 = sphi 0, %s88
      %s91 = sphi 0, %s90
      %s105 = sphi 0, %s91
      %s111 = sphi 0, %s113
      %s114 = sphi 0, %s111
      %s115 = sphi 0, %s114
      %s131 = sphi 0, %s115
      %s137 = sphi 0, %s139
      %s140 = sphi 0, %s137
      %s141 = sphi 0, %s140
      %s157 = sphi 0, %s141
    $region4: #{model_forward.1} parent=1 // loop_header_branch
      %20 = sbr.rel (%p18) target = $region8
    $region5: #{model_forward.1} parent=1 // loop_body
      %s22 = ssub.s32 %s17, 1
      %s23 = ssub.s32 %s17, 2
      %s24 = sadd.s32 %s17, 1
      %s26 = sadd.s32 %s25, 1
      %p29 = scmp.eq.s32.totalorder %s17, 1
      %p30 = scmp.ne.s32.totalorder %s25, %s27
      %p31 = scmp.eq.s32.totalorder %s17, 0
      %p32 = por %p30, %p31
      %p33 = scmp.ne.s32.totalorder %s25, %s27
      %p34 = scmp.eq.s32.totalorder %s22, 1
      %p35 = por %p33, %p34
      %p36 = scmp.ne.s32.totalorder %s27, %s28
      %p37 = scmp.eq.s32.totalorder %s22, 0
      %p38 = por %p36, %p37
      %p39 = scmp.ne.s32.totalorder %s27, %s28
      %p40 = scmp.eq.s32.totalorder %s23, 1
      %p41 = por %p39, %p40
      %p43 = scmp.ne.s32.totalorder %s28, %s42
      %p44 = scmp.eq.s32.totalorder %s23, 0
      %p45 = por %p43, %p44
      %s47 = sadd.s32 %s46, 1
      %p50 = scmp.eq.s32.totalorder %s17, 1
      %p51 = scmp.ne.s32.totalorder %s46, %s48
      %p52 = scmp.eq.s32.totalorder %s17, 0
      %p53 = por %p51, %p52
      %p54 = scmp.ne.s32.totalorder %s46, %s48
      %p55 = scmp.eq.s32.totalorder %s22, 1
      %p56 = por %p54, %p55
      %p57 = scmp.ne.s32.totalorder %s48, %s49
      %p58 = scmp.eq.s32.totalorder %s22, 0
      %p59 = por %p57, %p58
      %p60 = scmp.ne.s32.totalorder %s48, %s49
      %p61 = scmp.eq.s32.totalorder %s23, 1
      %p62 = por %p60, %p61
      %p64 = scmp.ne.s32.totalorder %s49, %s63
      %p65 = scmp.eq.s32.totalorder %s23, 0
      %p66 = por %p64, %p65
      %s68 = sadd.s32 %s67, 1
      %p71 = scmp.eq.s32.totalorder %s17, 1
      %p72 = scmp.ne.s32.totalorder %s67, %s69
      %p73 = scmp.eq.s32.totalorder %s17, 0
      %p74 = por %p72, %p73
      %p75 = scmp.ne.s32.totalorder %s67, %s69
      %p76 = scmp.eq.s32.totalorder %s22, 1
      %p77 = por %p75, %p76
      %p78 = scmp.ne.s32.totalorder %s69, %s70
      %p79 = scmp.eq.s32.totalorder %s22, 0
      %p80 = por %p78, %p79
      %p81 = scmp.ne.s32.totalorder %s69, %s70
      %p82 = scmp.eq.s32.totalorder %s23, 1
      %p83 = por %p81, %p82
      %p85 = scmp.ne.s32.totalorder %s70, %s84
      %p86 = scmp.eq.s32.totalorder %s23, 0
      %p87 = por %p85, %p86
      %s89 = sadd.s32 %s88, 1
      %p92 = scmp.eq.s32.totalorder %s17, 1
      %p93 = scmp.ne.s32.totalorder %s88, %s90
      %p94 = scmp.eq.s32.totalorder %s17, 0
      %p95 = por %p93, %p94
      %p96 = scmp.ne.s32.totalorder %s88, %s90
      %p97 = scmp.eq.s32.totalorder %s22, 1
      %p98 = por %p96, %p97
      %p99 = scmp.ne.s32.totalorder %s90, %s91
      %p100 = scmp.eq.s32.totalorder %s22, 0
      %p101 = por %p99, %p100
      %p102 = scmp.ne.s32.totalorder %s90, %s91
      %p103 = scmp.eq.s32.totalorder %s23, 1
      %p104 = por %p102, %p103
      %p106 = scmp.ne.s32.totalorder %s91, %s105
      %p107 = scmp.eq.s32.totalorder %s23, 0
      %p108 = por %p106, %p107
      %s109 = ssub.s32 %s17, %s24
      %p110 = scmp.eq.s32.totalorder %s109, 0
      %s112 = sadd.s32 %s111, 1
      %s113 = scalar_select %p110, %s111, %s112
      %p116 = pneg %p110
      %p117 = scmp.eq.s32.totalorder %s17, 1
      %p118 = por %p116, %p117
      %p119 = scmp.ne.s32.totalorder %s111, %s114
      %p120 = scmp.eq.s32.totalorder %s17, 0
      %p121 = por %p119, %p120
      %p122 = scmp.ne.s32.totalorder %s111, %s114
      %p123 = scmp.eq.s32.totalorder %s22, 1
      %p124 = por %p122, %p123
      %p125 = scmp.ne.s32.totalorder %s114, %s115
      %p126 = scmp.eq.s32.totalorder %s22, 0
      %p127 = por %p125, %p126
      %p128 = scmp.ne.s32.totalorder %s114, %s115
      %p129 = scmp.eq.s32.totalorder %s23, 1
      %p130 = por %p128, %p129
      %p132 = scmp.ne.s32.totalorder %s115, %s131
      %p133 = scmp.eq.s32.totalorder %s23, 0
      %p134 = por %p132, %p133
      %s135 = ssub.s32 %s17, %s24
      %p136 = scmp.eq.s32.totalorder %s135, 0
      %s138 = sadd.s32 %s137, 1
      %s139 = scalar_select %p136, %s137, %s138
      %p142 = pneg %p136
      %p143 = scmp.eq.s32.totalorder %s17, 1
      %p144 = por %p142, %p143
      %p145 = scmp.ne.s32.totalorder %s137, %s140
      %p146 = scmp.eq.s32.totalorder %s17, 0
      %p147 = por %p145, %p146
      %p148 = scmp.ne.s32.totalorder %s137, %s140
      %p149 = scmp.eq.s32.totalorder %s22, 1
      %p150 = por %p148, %p149
      %p151 = scmp.ne.s32.totalorder %s140, %s141
      %p152 = scmp.eq.s32.totalorder %s22, 0
      %p153 = por %p151, %p152
      %p154 = scmp.ne.s32.totalorder %s140, %s141
      %p155 = scmp.eq.s32.totalorder %s23, 1
      %p156 = por %p154, %p155
      %p158 = scmp.ne.s32.totalorder %s141, %s157
      %p159 = scmp.eq.s32.totalorder %s23, 0
      %p160 = por %p158, %p159
      %p161 = scmp.le.s32.totalorder 1, %s17
      %p162 = scmp.lt.s32.totalorder %s17, 3
      %p163 = pnand %p161, %p162
      %p164 = pneg %p163
      // Predicated region
      $region9: #{model_forward.1} parent=5 // pred_check
        _
      $region10: #{model_forward.1} parent=5 // pred_check_branch
        %166 = sbr.rel (%p163) target = $region12
      $region11: #{model_forward.1} parent=5 // pred_region
        %s167 = ssub.s32 %s17, 1
        // Predicated region
        $region13: #{model_forward.1} parent=11 // pred_check
          %p168 = pneg %p38
        $region14: #{model_forward.1} parent=11 // pred_check_branch
          %170 = sbr.rel (%p168) target = $region16
        $region15: #{model_forward.1} parent=11 // pred_region
          %s172 = ssub.s32 128, 128
          %173 = vsyncadd [#allocation4], %s172
          %s175 = sshll.u32 %s0, 4
          %s176 = int_to_ptr.vmem [resolvable:$true] %s175
          %178 = dma.vmem_to_smem %s176, 128, [#allocation2], [#allocation4]
        $region16: #{model_forward.1} parent=11 // pred_fallthru
          _
        // Predicated region
        $region17: #{model_forward.1} parent=11 // pred_check
          %p179 = pneg %p59
        $region18: #{model_forward.1} parent=11 // pred_check_branch
          %181 = sbr.rel (%p179) target = $region20
        $region19: #{model_forward.1} parent=11 // pred_region
          %s183 = ssub.s32 16, 16
          %184 = vsyncadd [#allocation6], %s183
          %s186 = sshll.u32 %s1, 4
          %s187 = int_to_ptr.vmem [resolvable:$true] %s186
          %189 = dma.vmem_to_smem %s187, 16, [#allocation5], [#allocation6]
        $region20: #{model_forward.1} parent=11 // pred_fallthru
          _
        // Predicated region
        $region21: #{model_forward.1} parent=11 // pred_check
          %p190 = pneg %p80
        $region22: #{model_forward.1} parent=11 // pred_check_branch
          %192 = sbr.rel (%p190) target = $region24
        $region23: #{model_forward.1} parent=11 // pred_region
          %s194 = ssub.s32 16, 16
          %195 = vsyncadd [#allocation6], %s194
          %s197 = sshll.u32 %s2, 4
          %s198 = int_to_ptr.vmem [resolvable:$true] %s197
          %200 = dma.vmem_to_smem %s198, 16, [#allocation7], [#allocation6]
        $region24: #{model_forward.1} parent=11 // pred_fallthru
          _
        // Predicated region
        $region25: #{model_forward.1} parent=11 // pred_check
          %p201 = pneg %p101
        $region26: #{model_forward.1} parent=11 // pred_check_branch
          %203 = sbr.rel (%p201) target = $region28
        $region27: #{model_forward.1} parent=11 // pred_region
          %s205 = ssub.s32 16, 16
          %206 = vsyncadd [#allocation9], %s205
          %s208 = sshll.u32 %s3, 4
          %s209 = int_to_ptr.vmem [resolvable:$true] %s208
          %211 = dma.vmem_to_smem %s209, 16, [#allocation8], [#allocation9]
        $region28: #{model_forward.1} parent=11 // pred_fallthru
          _
      $region12: #{model_forward.1} parent=5 // pred_fallthru
        _
      %p212 = scmp.lt.s32.totalorder %s17, 2
      // Predicated region
      $region29: #{model_forward.1} parent=5 // pred_check
        %p213 = pneg %p212
      $region30: #{model_forward.1} parent=5 // pred_check_branch
        %215 = sbr.rel (%p213) target = $region32
      $region31: #{model_forward.1} parent=5 // pred_region
        // Predicated region
        $region33: #{model_forward.1} parent=31 // pred_check
          %p216 = pneg %p121
        $region34: #{model_forward.1} parent=31 // pred_check_branch
          %218 = sbr.rel (%p216) target = $region36
        $region35: #{model_forward.1} parent=31 // pred_region
          %s219 = sand.u32 %s111, 1
          %s220 = scalar_lea.sflag [#allocation3], %s219
          %s221 = sand.u32 %s111, 1
          %s222 = smul.addr %s221, 128
          %s223 = scalar_lea.vmem [#allocation10], %s222
          %s225 = ssub.s32 2048, 2048
          %226 = vsyncadd %s220, %s225
          %s227 = smul.addr %s17, 16
          %s228 = smul.addr %s227, 128
          %s229 = scalar_lea.hbm %s4, %s228
          %s230 = sshll.u32 %s223, 4
          %s231 = int_to_ptr.vmem [resolvable:$true] %s230
          %236 = dma.hbm_to_vmem [thread:$0]  %s229, 2048, %s231, %s220, 128, 128, 8
        $region36: #{model_forward.1} parent=31 // pred_fallthru
          _
      $region32: #{model_forward.1} parent=5 // pred_fallthru
        _
      %p237 = scmp.le.s32.totalorder 1, %s17
      %p238 = scmp.lt.s32.totalorder %s17, 3
      %p239 = pnand %p237, %p238
      %p240 = pneg %p239
      // Predicated region
      $region37: #{model_forward.1} parent=5 // pred_check
        _
      $region38: #{model_forward.1} parent=5 // pred_check_branch
        %242 = sbr.rel (%p239) target = $region40
      $region39: #{model_forward.1} parent=5 // pred_region
        %s243 = ssub.s32 %s17, 1
        // Predicated region
        $region41: #{model_forward.1} parent=39 // pred_check
          %p244 = pneg %p38
        $region42: #{model_forward.1} parent=39 // pred_check_branch
          %246 = sbr.rel (%p244) target = $region44
        $region43: #{model_forward.1} parent=39 // pred_region
          %247 = dma.done [#allocation4], 128
        $region44: #{model_forward.1} parent=39 // pred_fallthru
          _
        // Predicated region
        $region45: #{model_forward.1} parent=39 // pred_check
          %p248 = pneg %p59
        $region46: #{model_forward.1} parent=39 // pred_check_branch
          %250 = sbr.rel (%p248) target = $region48
        $region47: #{model_forward.1} parent=39 // pred_region
          %251 = dma.done [#allocation6], 16
        $region48: #{model_forward.1} parent=39 // pred_fallthru
          _
        // Predicated region
        $region49: #{model_forward.1} parent=39 // pred_check
          %p252 = pneg %p80
        $region50: #{model_forward.1} parent=39 // pred_check_branch
          %254 = sbr.rel (%p252) target = $region52
        $region51: #{model_forward.1} parent=39 // pred_region
          %255 = dma.done [#allocation6], 16
        $region52: #{model_forward.1} parent=39 // pred_fallthru
          _
        // Predicated region
        $region53: #{model_forward.1} parent=39 // pred_check
          %p256 = pneg %p101
        $region54: #{model_forward.1} parent=39 // pred_check_branch
          %258 = sbr.rel (%p256) target = $region56
        $region55: #{model_forward.1} parent=39 // pred_region
          %259 = dma.done [#allocation9], 16
        $region56: #{model_forward.1} parent=39 // pred_fallthru
          _
        %s260 = sand.u32 %s114, 1
        %s261 = scalar_lea.sflag [#allocation3], %s260
        %s262 = sand.u32 %s114, 1
        %s263 = smul.addr %s262, 128
        %s264 = scalar_lea.vmem [#allocation10], %s263
        // Predicated region
        $region57: #{model_forward.1} parent=39 // pred_check
          %p265 = pneg %p127
        $region58: #{model_forward.1} parent=39 // pred_check_branch
          %267 = sbr.rel (%p265) target = $region60
        $region59: #{model_forward.1} parent=39 // pred_region
          %268 = dma.done %s261, 2048
        $region60: #{model_forward.1} parent=39 // pred_fallthru
          _
        %269 = sfence
        %p270 = pneg %p38
        %p271 = pneg %p35
        %p272 = pneg %p59
        %p273 = pneg %p56
        %p274 = pneg %p80
        %p275 = pneg %p77
        %p276 = pneg %p101
        %p277 = pneg %p98
        %s278 = sand.u32 %s114, 1
        %s279 = scalar_lea.sflag [#allocation3], %s278
        %s280 = sand.u32 %s114, 1
        %s281 = smul.addr %s280, 128
        %s282 = scalar_lea.vmem [#allocation10], %s281
        %p283 = pneg %p127
        %p284 = pneg %p124
        %p285 = pneg %p153
        %p286 = pneg %p150
        %p287 = scmp.lt.s32.totalorder %s22, 1
        %s288 = scalar_select %p287, %s22, 1
        %s289 = smul.addr %s288, 24
        %s290 = smul.addr %s289, 8
        %s291 = scalar_lea.vmem %s5, %s290
        %p292 = scmp.lt.s32.totalorder %s22, 1
        %s293 = scalar_select %p292, %s22, 1
        %s294 = smul.addr %s293, 24
        %s295 = smul.addr %s294, 8
        %s296 = scalar_lea.vmem %s5, %s295
        %v297 = vlaneseq
        %v298 = vshrl.u32 %v297, 7
        %v299 = vadd.s32 %v298, 8
        %v300 = vadd.s32 %v298, 16
        %v301 = vlaneseq
        %v302 = vand.u32 %v301, 127
        %vm303 = vcmp.eq.s32.totalorder %v298, 0
        %vm304 = vcmp.eq.s32.totalorder %v299, 0
        %vm305 = vcmp.eq.s32.totalorder %v300, 0
        %vm306 = vcmp.eq.s32.totalorder %v298, 19
        %vm307 = vcmp.eq.s32.totalorder %v299, 19
        %vm308 = vcmp.eq.s32.totalorder %v300, 19
        %vm309 = vmor %vm303, %vm306
        %vm310 = vmor %vm304, %vm307
        %vm311 = vmor %vm305, %vm308
        %vm312 = vcmp.eq.s32.totalorder %v302, 0
        %vm313 = vmor %vm309, %vm312
        %vm314 = vmor %vm310, %vm312
        %vm315 = vmor %vm311, %vm312
        %vm316 = vcmp.eq.s32.totalorder %v302, 19
        %vm317 = vmor %vm313, %vm316
        %vm318 = vmor %vm314, %vm316
        %vm319 = vmor %vm315, %vm316
        %v320 = vld [vmem:[%s264] sm:$0xff]
        %v321 = vld [vmem:[%s264 + $0x8] sm:$0xff]
        %s322 = sld [smem:[#allocation2]]
        %v323 = vstv %s322
        %v324 = vmul.f32 %v320, %v323
        %v325 = vmul.f32 %v321, %v323
        %s326 = scalar_lea.vmem %s264, 16 [#allocation10]
        %v327 = vld [vmem:[%s326] sm:$0xff]
        %v328 = vld [vmem:[%s326 + $0x8] sm:$0xff]
        %s329 = sld [smem:[#allocation2 + $0x1]]
        %v330 = vstv %s329
        %v331 = vmul.f32 %v327, %v330
        %v332 = vmul.f32 %v328, %v330
        %v333 = vadd.f32 %v324, %v331
        %v334 = vadd.f32 %v325, %v332
        %s335 = scalar_lea.vmem %s264, 32 [#allocation10]
        %v336 = vld [vmem:[%s335] sm:$0xff]
        %v337 = vld [vmem:[%s335 + $0x8] sm:$0xff]
        %s338 = sld [smem:[#allocation2 + $0x2]]
        %v339 = vstv %s338
        %v340 = vmul.f32 %v336, %v339
        %v341 = vmul.f32 %v337, %v339
        %v342 = vadd.f32 %v333, %v340
        %v343 = vadd.f32 %v334, %v341
        %s344 = scalar_lea.vmem %s264, 48 [#allocation10]
        %v345 = vld [vmem:[%s344] sm:$0xff]
        %v346 = vld [vmem:[%s344 + $0x8] sm:$0xff]
        %s347 = sld [smem:[#allocation2 + $0x3]]
        %v348 = vstv %s347
        %v349 = vmul.f32 %v345, %v348
        %v350 = vmul.f32 %v346, %v348
        %v351 = vadd.f32 %v342, %v349
        %v352 = vadd.f32 %v343, %v350
        %s353 = scalar_lea.vmem %s264, 64 [#allocation10]
        %v354 = vld [vmem:[%s353] sm:$0xff]
        %v355 = vld [vmem:[%s353 + $0x8] sm:$0xff]
        %s356 = sld [smem:[#allocation2 + $0x4]]
        %v357 = vstv %s356
        %v358 = vmul.f32 %v354, %v357
        %v359 = vmul.f32 %v355, %v357
        %v360 = vadd.f32 %v351, %v358
        %v361 = vadd.f32 %v352, %v359
        %s362 = scalar_lea.vmem %s264, 80 [#allocation10]
        %v363 = vld [vmem:[%s362] sm:$0xff]
        %v364 = vld [vmem:[%s362 + $0x8] sm:$0xff]
        %s365 = sld [smem:[#allocation2 + $0x5]]
        %v366 = vstv %s365
        %v367 = vmul.f32 %v363, %v366
        %v368 = vmul.f32 %v364, %v366
        %v369 = vadd.f32 %v360, %v367
        %v370 = vadd.f32 %v361, %v368
        %s371 = scalar_lea.vmem %s264, 96 [#allocation10]
        %v372 = vld [vmem:[%s371] sm:$0xff]
        %v373 = vld [vmem:[%s371 + $0x8] sm:$0xff]
        %s374 = sld [smem:[#allocation2 + $0x6]]
        %v375 = vstv %s374
        %v376 = vmul.f32 %v372, %v375
        %v377 = vmul.f32 %v373, %v375
        %v378 = vadd.f32 %v369, %v376
        %v379 = vadd.f32 %v370, %v377
        %s380 = scalar_lea.vmem %s264, 112 [#allocation10]
        %v381 = vld [vmem:[%s380] sm:$0xff]
        %v382 = vld [vmem:[%s380 + $0x8] sm:$0xff]
        %s383 = sld [smem:[#allocation2 + $0x7]]
        %v384 = vstv %s383
        %v385 = vmul.f32 %v381, %v384
        %v386 = vmul.f32 %v382, %v384
        %v387 = vadd.f32 %v378, %v385
        %v388 = vadd.f32 %v379, %v386
        %s389 = sld [smem:[#allocation5]]
        %v390 = vstv %s389
        %v391 = vadd.f32 %v387, %v390
        %v392 = vadd.f32 %v388, %v390
        %v393 = vmax.f32 %v391, 0.0
        %v394 = vmax.f32 %v392, 0.0
        %v395 = vmin.f32 %v393, 1.0
        %v396 = vmin.f32 %v394, 1.0
        %s397 = sld [smem:[#allocation7]]
        %s398 = sld [smem:[#allocation8]]
        %v399 = vstv %s397
        %v400 = vstv %s398
        %v401 = vsel %vm317, %v399, %v400
        %v402 = vsel %vm318, %v399, %v400
        %v403 = vsel %vm319, %v399, %v400
        %vm404 = vcmask 162816
        %405 = vst.msk [vmem:[%s296] sm:$0xff] %vm404, %v401
        %406 = vst.msk [vmem:[%s296 + $0x8] sm:$0xff] %vm404, %v402
        %vm407 = vcmask 158720
        %408 = vst.msk [vmem:[%s296 + $0x10] sm:$0xf] %vm407, %v403
        %411 = vrot.lane.b32.xlu0 %v395, 2
        %v412 = vpop.permute.xlu0 %411
        %413 = vrot.lane.b32.xlu0 %v396, 2
        %v414 = vpop.permute.xlu0 %413
        %vm417 = vcmask 146448
        %418 = vst.msk [vmem:[%s296 + $0x2] sm:$0xff] %vm417, %v412
        %419 = vst.msk [vmem:[%s296 + $0xa] sm:$0xff] %vm417, %v414
        %v420 = vld [vmem:[%s264] sm:$0xff]
        %v421 = vld [vmem:[%s264 + $0x8] sm:$0xff]
        %s422 = sld [smem:[#allocation2 + $0x80]]
        %v423 = vstv %s422
        %v424 = vmul.f32 %v420, %v423
        %v425 = vmul.f32 %v421, %v423
        %v426 = vld [vmem:[%s326] sm:$0xff]
        %v427 = vld [vmem:[%s326 + $0x8] sm:$0xff]
        %s428 = sld [smem:[#allocation2 + $0x81]]
        %v429 = vstv %s428
        %v430 = vmul.f32 %v426, %v429
        %v431 = vmul.f32 %v427, %v429
        %v432 = vadd.f32 %v424, %v430
        %v433 = vadd.f32 %v425, %v431
        %v434 = vld [vmem:[%s335] sm:$0xff]
        %v435 = vld [vmem:[%s335 + $0x8] sm:$0xff]
        %s436 = sld [smem:[#allocation2 + $0x82]]
        %v437 = vstv %s436
        %v438 = vmul.f32 %v434, %v437
        %v439 = vmul.f32 %v435, %v437
        %v440 = vadd.f32 %v432, %v438
        %v441 = vadd.f32 %v433, %v439
        %v442 = vld [vmem:[%s344] sm:$0xff]
        %v443 = vld [vmem:[%s344 + $0x8] sm:$0xff]
        %s444 = sld [smem:[#allocation2 + $0x83]]
        %v445 = vstv %s444
        %v446 = vmul.f32 %v442, %v445
        %v447 = vmul.f32 %v443, %v445
        %v448 = vadd.f32 %v440, %v446
        %v449 = vadd.f32 %v441, %v447
        %v450 = vld [vmem:[%s353] sm:$0xff]
        %v451 = vld [vmem:[%s353 + $0x8] sm:$0xff]
        %s452 = sld [smem:[#allocation2 + $0x84]]
        %v453 = vstv %s452
        %v454 = vmul.f32 %v450, %v453
        %v455 = vmul.f32 %v451, %v453
        %v456 = vadd.f32 %v448, %v454
        %v457 = vadd.f32 %v449, %v455
        %v458 = vld [vmem:[%s362] sm:$0xff]
        %v459 = vld [vmem:[%s362 + $0x8] sm:$0xff]
        %s460 = sld [smem:[#allocation2 + $0x85]]
        %v461 = vstv %s460
        %v462 = vmul.f32 %v458, %v461
        %v463 = vmul.f32 %v459, %v461
        %v464 = vadd.f32 %v456, %v462
        %v465 = vadd.f32 %v457, %v463
        %v466 = vld [vmem:[%s371] sm:$0xff]
        %v467 = vld [vmem:[%s371 + $0x8] sm:$0xff]
        %s468 = sld [smem:[#allocation2 + $0x86]]
        %v469 = vstv %s468
        %v470 = vmul.f32 %v466, %v469
        %v471 = vmul.f32 %v467, %v469
        %v472 = vadd.f32 %v464, %v470
        %v473 = vadd.f32 %v465, %v471
        %v474 = vld [vmem:[%s380] sm:$0xff]
        %v475 = vld [vmem:[%s380 + $0x8] sm:$0xff]
        %s476 = sld [smem:[#allocation2 + $0x87]]
        %v477 = vstv %s476
        %v478 = vmul.f32 %v474, %v477
        %v479 = vmul.f32 %v475, %v477
        %v480 = vadd.f32 %v472, %v478
        %v481 = vadd.f32 %v473, %v479
        %s482 = sld [smem:[#allocation5 + $0x1]]
        %v483 = vstv %s482
        %v484 = vadd.f32 %v480, %v483
        %v485 = vadd.f32 %v481, %v483
        %v486 = vmax.f32 %v484, 0.0
        %v487 = vmax.f32 %v485, 0.0
        %v488 = vmin.f32 %v486, 1.0
        %v489 = vmin.f32 %v487, 1.0
        %s490 = sld [smem:[#allocation7 + $0x1]]
        %s491 = sld [smem:[#allocation8 + $0x1]]
        %v492 = vstv %s490
        %v493 = vstv %s491
        %v494 = vsel %vm317, %v492, %v493
        %v495 = vsel %vm318, %v492, %v493
        %v496 = vsel %vm319, %v492, %v493
        %s497 = scalar_lea.vmem %s296, 24
        %498 = vst.msk [vmem:[%s497] sm:$0xff] %vm404, %v494
        %499 = vst.msk [vmem:[%s497 + $0x8] sm:$0xff] %vm404, %v495
        %500 = vst.msk [vmem:[%s497 + $0x10] sm:$0xf] %vm407, %v496
        %503 = vrot.lane.b32.xlu0 %v488, 2
        %v504 = vpop.permute.xlu0 %503
        %505 = vrot.lane.b32.xlu0 %v489, 2
        %v506 = vpop.permute.xlu0 %505
        %509 = vst.msk [vmem:[%s497 + $0x2] sm:$0xff] %vm417, %v504
        %510 = vst.msk [vmem:[%s497 + $0xa] sm:$0xff] %vm417, %v506
        %v511 = vld [vmem:[%s264] sm:$0xff]
        %v512 = vld [vmem:[%s264 + $0x8] sm:$0xff]
        %s513 = sld [smem:[#allocation2 + $0x100]]
        %v514 = vstv %s513
        %v515 = vmul.f32 %v511, %v514
        %v516 = vmul.f32 %v512, %v514
        %v517 = vld [vmem:[%s326] sm:$0xff]
        %v518 = vld [vmem:[%s326 + $0x8] sm:$0xff]
        %s519 = sld [smem:[#allocation2 + $0x101]]
        %v520 = vstv %s519
        %v521 = vmul.f32 %v517, %v520
        %v522 = vmul.f32 %v518, %v520
        %v523 = vadd.f32 %v515, %v521
        %v524 = vadd.f32 %v516, %v522
        %v525 = vld [vmem:[%s335] sm:$0xff]
        %v526 = vld [vmem:[%s335 + $0x8] sm:$0xff]
        %s527 = sld [smem:[#allocation2 + $0x102]]
        %v528 = vstv %s527
        %v529 = vmul.f32 %v525, %v528
        %v530 = vmul.f32 %v526, %v528
        %v531 = vadd.f32 %v523, %v529
        %v532 = vadd.f32 %v524, %v530
        %v533 = vld [vmem:[%s344] sm:$0xff]
        %v534 = vld [vmem:[%s344 + $0x8] sm:$0xff]
        %s535 = sld [smem:[#allocation2 + $0x103]]
        %v536 = vstv %s535
        %v537 = vmul.f32 %v533, %v536
        %v538 = vmul.f32 %v534, %v536
        %v539 = vadd.f32 %v531, %v537
        %v540 = vadd.f32 %v532, %v538
        %v541 = vld [vmem:[%s353] sm:$0xff]
        %v542 = vld [vmem:[%s353 + $0x8] sm:$0xff]
        %s543 = sld [smem:[#allocation2 + $0x104]]
        %v544 = vstv %s543
        %v545 = vmul.f32 %v541, %v544
        %v546 = vmul.f32 %v542, %v544
        %v547 = vadd.f32 %v539, %v545
        %v548 = vadd.f32 %v540, %v546
        %v549 = vld [vmem:[%s362] sm:$0xff]
        %v550 = vld [vmem:[%s362 + $0x8] sm:$0xff]
        %s551 = sld [smem:[#allocation2 + $0x105]]
        %v552 = vstv %s551
        %v553 = vmul.f32 %v549, %v552
        %v554 = vmul.f32 %v550, %v552
        %v555 = vadd.f32 %v547, %v553
        %v556 = vadd.f32 %v548, %v554
        %v557 = vld [vmem:[%s371] sm:$0xff]
        %v558 = vld [vmem:[%s371 + $0x8] sm:$0xff]
        %s559 = sld [smem:[#allocation2 + $0x106]]
        %v560 = vstv %s559
        %v561 = vmul.f32 %v557, %v560
        %v562 = vmul.f32 %v558, %v560
        %v563 = vadd.f32 %v555, %v561
        %v564 = vadd.f32 %v556, %v562
        %v565 = vld [vmem:[%s380] sm:$0xff]
        %v566 = vld [vmem:[%s380 + $0x8] sm:$0xff]
        %s567 = sld [smem:[#allocation2 + $0x107]]
        %v568 = vstv %s567
        %v569 = vmul.f32 %v565, %v568
        %v570 = vmul.f32 %v566, %v568
        %v571 = vadd.f32 %v563, %v569
        %v572 = vadd.f32 %v564, %v570
        %s573 = sld [smem:[#allocation5 + $0x2]]
        %v574 = vstv %s573
        %v575 = vadd.f32 %v571, %v574
        %v576 = vadd.f32 %v572, %v574
        %v577 = vmax.f32 %v575, 0.0
        %v578 = vmax.f32 %v576, 0.0
        %v579 = vmin.f32 %v577, 1.0
        %v580 = vmin.f32 %v578, 1.0
        %s581 = sld [smem:[#allocation7 + $0x2]]
        %s582 = sld [smem:[#allocation8 + $0x2]]
        %v583 = vstv %s581
        %v584 = vstv %s582
        %v585 = vsel %vm317, %v583, %v584
        %v586 = vsel %vm318, %v583, %v584
        %v587 = vsel %vm319, %v583, %v584
        %s588 = scalar_lea.vmem %s296, 48
        %589 = vst.msk [vmem:[%s588] sm:$0xff] %vm404, %v585
        %590 = vst.msk [vmem:[%s588 + $0x8] sm:$0xff] %vm404, %v586
        %591 = vst.msk [vmem:[%s588 + $0x10] sm:$0xf] %vm407, %v587
        %594 = vrot.lane.b32.xlu0 %v579, 2
        %v595 = vpop.permute.xlu0 %594
        %596 = vrot.lane.b32.xlu0 %v580, 2
        %v597 = vpop.permute.xlu0 %596
        %600 = vst.msk [vmem:[%s588 + $0x2] sm:$0xff] %vm417, %v595
        %601 = vst.msk [vmem:[%s588 + $0xa] sm:$0xff] %vm417, %v597
        %v602 = vld [vmem:[%s264] sm:$0xff]
        %v603 = vld [vmem:[%s264 + $0x8] sm:$0xff]
        %s604 = sld [smem:[#allocation2 + $0x180]]
        %v605 = vstv %s604
        %v606 = vmul.f32 %v602, %v605
        %v607 = vmul.f32 %v603, %v605
        %v608 = vld [vmem:[%s326] sm:$0xff]
        %v609 = vld [vmem:[%s326 + $0x8] sm:$0xff]
        %s610 = sld [smem:[#allocation2 + $0x181]]
        %v611 = vstv %s610
        %v612 = vmul.f32 %v608, %v611
        %v613 = vmul.f32 %v609, %v611
        %v614 = vadd.f32 %v606, %v612
        %v615 = vadd.f32 %v607, %v613
        %v616 = vld [vmem:[%s335] sm:$0xff]
        %v617 = vld [vmem:[%s335 + $0x8] sm:$0xff]
        %s618 = sld [smem:[#allocation2 + $0x182]]
        %v619 = vstv %s618
        %v620 = vmul.f32 %v616, %v619
        %v621 = vmul.f32 %v617, %v619
        %v622 = vadd.f32 %v614, %v620
        %v623 = vadd.f32 %v615, %v621
        %v624 = vld [vmem:[%s344] sm:$0xff]
        %v625 = vld [vmem:[%s344 + $0x8] sm:$0xff]
        %s626 = sld [smem:[#allocation2 + $0x183]]
        %v627 = vstv %s626
        %v628 = vmul.f32 %v624, %v627
        %v629 = vmul.f32 %v625, %v627
        %v630 = vadd.f32 %v622, %v628
        %v631 = vadd.f32 %v623, %v629
        %v632 = vld [vmem:[%s353] sm:$0xff]
        %v633 = vld [vmem:[%s353 + $0x8] sm:$0xff]
        %s634 = sld [smem:[#allocation2 + $0x184]]
        %v635 = vstv %s634
        %v636 = vmul.f32 %v632, %v635
        %v637 = vmul.f32 %v633, %v635
        %v638 = vadd.f32 %v630, %v636
        %v639 = vadd.f32 %v631, %v637
        %v640 = vld [vmem:[%s362] sm:$0xff]
        %v641 = vld [vmem:[%s362 + $0x8] sm:$0xff]
        %s642 = sld [smem:[#allocation2 + $0x185]]
        %v643 = vstv %s642
        %v644 = vmul.f32 %v640, %v643
        %v645 = vmul.f32 %v641, %v643
        %v646 = vadd.f32 %v638, %v644
        %v647 = vadd.f32 %v639, %v645
        %v648 = vld [vmem:[%s371] sm:$0xff]
        %v649 = vld [vmem:[%s371 + $0x8] sm:$0xff]
        %s650 = sld [smem:[#allocation2 + $0x186]]
        %v651 = vstv %s650
        %v652 = vmul.f32 %v648, %v651
        %v653 = vmul.f32 %v649, %v651
        %v654 = vadd.f32 %v646, %v652
        %v655 = vadd.f32 %v647, %v653
        %v656 = vld [vmem:[%s380] sm:$0xff]
        %v657 = vld [vmem:[%s380 + $0x8] sm:$0xff]
        %s658 = sld [smem:[#allocation2 + $0x187]]
        %v659 = vstv %s658
        %v660 = vmul.f32 %v656, %v659
        %v661 = vmul.f32 %v657, %v659
        %v662 = vadd.f32 %v654, %v660
        %v663 = vadd.f32 %v655, %v661
        %s664 = sld [smem:[#allocation5 + $0x3]]
        %v665 = vstv %s664
        %v666 = vadd.f32 %v662, %v665
        %v667 = vadd.f32 %v663, %v665
        %v668 = vmax.f32 %v666, 0.0
        %v669 = vmax.f32 %v667, 0.0
        %v670 = vmin.f32 %v668, 1.0
        %v671 = vmin.f32 %v669, 1.0
        %s672 = sld [smem:[#allocation7 + $0x3]]
        %s673 = sld [smem:[#allocation8 + $0x3]]
        %v674 = vstv %s672
        %v675 = vstv %s673
        %v676 = vsel %vm317, %v674, %v675
        %v677 = vsel %vm318, %v674, %v675
        %v678 = vsel %vm319, %v674, %v675
        %s679 = scalar_lea.vmem %s296, 72
        %680 = vst.msk [vmem:[%s679] sm:$0xff] %vm404, %v676
        %681 = vst.msk [vmem:[%s679 + $0x8] sm:$0xff] %vm404, %v677
        %682 = vst.msk [vmem:[%s679 + $0x10] sm:$0xf] %vm407, %v678
        %685 = vrot.lane.b32.xlu0 %v670, 2
        %v686 = vpop.permute.xlu0 %685
        %687 = vrot.lane.b32.xlu0 %v671, 2
        %v688 = vpop.permute.xlu0 %687
        %691 = vst.msk [vmem:[%s679 + $0x2] sm:$0xff] %vm417, %v686
        %692 = vst.msk [vmem:[%s679 + $0xa] sm:$0xff] %vm417, %v688
        %v693 = vld [vmem:[%s264] sm:$0xff]
        %v694 = vld [vmem:[%s264 + $0x8] sm:$0xff]
        %s695 = sld [smem:[#allocation2 + $0x200]]
        %v696 = vstv %s695
        %v697 = vmul.f32 %v693, %v696
        %v698 = vmul.f32 %v694, %v696
        %v699 = vld [vmem:[%s326] sm:$0xff]
        %v700 = vld [vmem:[%s326 + $0x8] sm:$0xff]
        %s701 = sld [smem:[#allocation2 + $0x201]]
        %v702 = vstv %s701
        %v703 = vmul.f32 %v699, %v702
        %v704 = vmul.f32 %v700, %v702
        %v705 = vadd.f32 %v697, %v703
        %v706 = vadd.f32 %v698, %v704
        %v707 = vld [vmem:[%s335] sm:$0xff]
        %v708 = vld [vmem:[%s335 + $0x8] sm:$0xff]
        %s709 = sld [smem:[#allocation2 + $0x202]]
        %v710 = vstv %s709
        %v711 = vmul.f32 %v707, %v710
        %v712 = vmul.f32 %v708, %v710
        %v713 = vadd.f32 %v705, %v711
        %v714 = vadd.f32 %v706, %v712
        %v715 = vld [vmem:[%s344] sm:$0xff]
        %v716 = vld [vmem:[%s344 + $0x8] sm:$0xff]
        %s717 = sld [smem:[#allocation2 + $0x203]]
        %v718 = vstv %s717
        %v719 = vmul.f32 %v715, %v718
        %v720 = vmul.f32 %v716, %v718
        %v721 = vadd.f32 %v713, %v719
        %v722 = vadd.f32 %v714, %v720
        %v723 = vld [vmem:[%s353] sm:$0xff]
        %v724 = vld [vmem:[%s353 + $0x8] sm:$0xff]
        %s725 = sld [smem:[#allocation2 + $0x204]]
        %v726 = vstv %s725
        %v727 = vmul.f32 %v723, %v726
        %v728 = vmul.f32 %v724, %v726
        %v729 = vadd.f32 %v721, %v727
        %v730 = vadd.f32 %v722, %v728
        %v731 = vld [vmem:[%s362] sm:$0xff]
        %v732 = vld [vmem:[%s362 + $0x8] sm:$0xff]
        %s733 = sld [smem:[#allocation2 + $0x205]]
        %v734 = vstv %s733
        %v735 = vmul.f32 %v731, %v734
        %v736 = vmul.f32 %v732, %v734
        %v737 = vadd.f32 %v729, %v735
        %v738 = vadd.f32 %v730, %v736
        %v739 = vld [vmem:[%s371] sm:$0xff]
        %v740 = vld [vmem:[%s371 + $0x8] sm:$0xff]
        %s741 = sld [smem:[#allocation2 + $0x206]]
        %v742 = vstv %s741
        %v743 = vmul.f32 %v739, %v742
        %v744 = vmul.f32 %v740, %v742
        %v745 = vadd.f32 %v737, %v743
        %v746 = vadd.f32 %v738, %v744
        %v747 = vld [vmem:[%s380] sm:$0xff]
        %v748 = vld [vmem:[%s380 + $0x8] sm:$0xff]
        %s749 = sld [smem:[#allocation2 + $0x207]]
        %v750 = vstv %s749
        %v751 = vmul.f32 %v747, %v750
        %v752 = vmul.f32 %v748, %v750
        %v753 = vadd.f32 %v745, %v751
        %v754 = vadd.f32 %v746, %v752
        %s755 = sld [smem:[#allocation5 + $0x4]]
        %v756 = vstv %s755
        %v757 = vadd.f32 %v753, %v756
        %v758 = vadd.f32 %v754, %v756
        %v759 = vmax.f32 %v757, 0.0
        %v760 = vmax.f32 %v758, 0.0
        %v761 = vmin.f32 %v759, 1.0
        %v762 = vmin.f32 %v760, 1.0
        %s763 = sld [smem:[#allocation7 + $0x4]]
        %s764 = sld [smem:[#allocation8 + $0x4]]
        %v765 = vstv %s763
        %v766 = vstv %s764
        %v767 = vsel %vm317, %v765, %v766
        %v768 = vsel %vm318, %v765, %v766
        %v769 = vsel %vm319, %v765, %v766
        %s770 = scalar_lea.vmem %s296, 96
        %771 = vst.msk [vmem:[%s770] sm:$0xff] %vm404, %v767
        %772 = vst.msk [vmem:[%s770 + $0x8] sm:$0xff] %vm404, %v768
        %773 = vst.msk [vmem:[%s770 + $0x10] sm:$0xf] %vm407, %v769
        %776 = vrot.lane.b32.xlu0 %v761, 2
        %v777 = vpop.permute.xlu0 %776
        %778 = vrot.lane.b32.xlu0 %v762, 2
        %v779 = vpop.permute.xlu0 %778
        %782 = vst.msk [vmem:[%s770 + $0x2] sm:$0xff] %vm417, %v777
        %783 = vst.msk [vmem:[%s770 + $0xa] sm:$0xff] %vm417, %v779
        %v784 = vld [vmem:[%s264] sm:$0xff]
        %v785 = vld [vmem:[%s264 + $0x8] sm:$0xff]
        %s786 = sld [smem:[#allocation2 + $0x280]]
        %v787 = vstv %s786
        %v788 = vmul.f32 %v784, %v787
        %v789 = vmul.f32 %v785, %v787
        %v790 = vld [vmem:[%s326] sm:$0xff]
        %v791 = vld [vmem:[%s326 + $0x8] sm:$0xff]
        %s792 = sld [smem:[#allocation2 + $0x281]]
        %v793 = vstv %s792
        %v794 = vmul.f32 %v790, %v793
        %v795 = vmul.f32 %v791, %v793
        %v796 = vadd.f32 %v788, %v794
        %v797 = vadd.f32 %v789, %v795
        %v798 = vld [vmem:[%s335] sm:$0xff]
        %v799 = vld [vmem:[%s335 + $0x8] sm:$0xff]
        %s800 = sld [smem:[#allocation2 + $0x282]]
        %v801 = vstv %s800
        %v802 = vmul.f32 %v798, %v801
        %v803 = vmul.f32 %v799, %v801
        %v804 = vadd.f32 %v796, %v802
        %v805 = vadd.f32 %v797, %v803
        %v806 = vld [vmem:[%s344] sm:$0xff]
        %v807 = vld [vmem:[%s344 + $0x8] sm:$0xff]
        %s808 = sld [smem:[#allocation2 + $0x283]]
        %v809 = vstv %s808
        %v810 = vmul.f32 %v806, %v809
        %v811 = vmul.f32 %v807, %v809
        %v812 = vadd.f32 %v804, %v810
        %v813 = vadd.f32 %v805, %v811
        %v814 = vld [vmem:[%s353] sm:$0xff]
        %v815 = vld [vmem:[%s353 + $0x8] sm:$0xff]
        %s816 = sld [smem:[#allocation2 + $0x284]]
        %v817 = vstv %s816
        %v818 = vmul.f32 %v814, %v817
        %v819 = vmul.f32 %v815, %v817
        %v820 = vadd.f32 %v812, %v818
        %v821 = vadd.f32 %v813, %v819
        %v822 = vld [vmem:[%s362] sm:$0xff]
        %v823 = vld [vmem:[%s362 + $0x8] sm:$0xff]
        %s824 = sld [smem:[#allocation2 + $0x285]]
        %v825 = vstv %s824
        %v826 = vmul.f32 %v822, %v825
        %v827 = vmul.f32 %v823, %v825
        %v828 = vadd.f32 %v820, %v826
        %v829 = vadd.f32 %v821, %v827
        %v830 = vld [vmem:[%s371] sm:$0xff]
        %v831 = vld [vmem:[%s371 + $0x8] sm:$0xff]
        %s832 = sld [smem:[#allocation2 + $0x286]]
        %v833 = vstv %s832
        %v834 = vmul.f32 %v830, %v833
        %v835 = vmul.f32 %v831, %v833
        %v836 = vadd.f32 %v828, %v834
        %v837 = vadd.f32 %v829, %v835
        %v838 = vld [vmem:[%s380] sm:$0xff]
        %v839 = vld [vmem:[%s380 + $0x8] sm:$0xff]
        %s840 = sld [smem:[#allocation2 + $0x287]]
        %v841 = vstv %s840
        %v842 = vmul.f32 %v838, %v841
        %v843 = vmul.f32 %v839, %v841
        %v844 = vadd.f32 %v836, %v842
        %v845 = vadd.f32 %v837, %v843
        %s846 = sld [smem:[#allocation5 + $0x5]]
        %v847 = vstv %s846
        %v848 = vadd.f32 %v844, %v847
        %v849 = vadd.f32 %v845, %v847
        %v850 = vmax.f32 %v848, 0.0
        %v851 = vmax.f32 %v849, 0.0
        %v852 = vmin.f32 %v850, 1.0
        %v853 = vmin.f32 %v851, 1.0
        %s854 = sld [smem:[#allocation7 + $0x5]]
        %s855 = sld [smem:[#allocation8 + $0x5]]
        %v856 = vstv %s854
        %v857 = vstv %s855
        %v858 = vsel %vm317, %v856, %v857
        %v859 = vsel %vm318, %v856, %v857
        %v860 = vsel %vm319, %v856, %v857
        %s861 = scalar_lea.vmem %s296, 120
        %862 = vst.msk [vmem:[%s861] sm:$0xff] %vm404, %v858
        %863 = vst.msk [vmem:[%s861 + $0x8] sm:$0xff] %vm404, %v859
        %864 = vst.msk [vmem:[%s861 + $0x10] sm:$0xf] %vm407, %v860
        %867 = vrot.lane.b32.xlu0 %v852, 2
        %v868 = vpop.permute.xlu0 %867
        %869 = vrot.lane.b32.xlu0 %v853, 2
        %v870 = vpop.permute.xlu0 %869
        %873 = vst.msk [vmem:[%s861 + $0x2] sm:$0xff] %vm417, %v868
        %874 = vst.msk [vmem:[%s861 + $0xa] sm:$0xff] %vm417, %v870
        %v875 = vld [vmem:[%s264] sm:$0xff]
        %v876 = vld [vmem:[%s264 + $0x8] sm:$0xff]
        %s877 = sld [smem:[#allocation2 + $0x300]]
        %v878 = vstv %s877
        %v879 = vmul.f32 %v875, %v878
        %v880 = vmul.f32 %v876, %v878
        %v881 = vld [vmem:[%s326] sm:$0xff]
        %v882 = vld [vmem:[%s326 + $0x8] sm:$0xff]
        %s883 = sld [smem:[#allocation2 + $0x301]]
        %v884 = vstv %s883
        %v885 = vmul.f32 %v881, %v884
        %v886 = vmul.f32 %v882, %v884
        %v887 = vadd.f32 %v879, %v885
        %v888 = vadd.f32 %v880, %v886
        %v889 = vld [vmem:[%s335] sm:$0xff]
        %v890 = vld [vmem:[%s335 + $0x8] sm:$0xff]
        %s891 = sld [smem:[#allocation2 + $0x302]]
        %v892 = vstv %s891
        %v893 = vmul.f32 %v889, %v892
        %v894 = vmul.f32 %v890, %v892
        %v895 = vadd.f32 %v887, %v893
        %v896 = vadd.f32 %v888, %v894
        %v897 = vld [vmem:[%s344] sm:$0xff]
        %v898 = vld [vmem:[%s344 + $0x8] sm:$0xff]
        %s899 = sld [smem:[#allocation2 + $0x303]]
        %v900 = vstv %s899
        %v901 = vmul.f32 %v897, %v900
        %v902 = vmul.f32 %v898, %v900
        %v903 = vadd.f32 %v895, %v901
        %v904 = vadd.f32 %v896, %v902
        %v905 = vld [vmem:[%s353] sm:$0xff]
        %v906 = vld [vmem:[%s353 + $0x8] sm:$0xff]
        %s907 = sld [smem:[#allocation2 + $0x304]]
        %v908 = vstv %s907
        %v909 = vmul.f32 %v905, %v908
        %v910 = vmul.f32 %v906, %v908
        %v911 = vadd.f32 %v903, %v909
        %v912 = vadd.f32 %v904, %v910
        %v913 = vld [vmem:[%s362] sm:$0xff]
        %v914 = vld [vmem:[%s362 + $0x8] sm:$0xff]
        %s915 = sld [smem:[#allocation2 + $0x305]]
        %v916 = vstv %s915
        %v917 = vmul.f32 %v913, %v916
        %v918 = vmul.f32 %v914, %v916
        %v919 = vadd.f32 %v911, %v917
        %v920 = vadd.f32 %v912, %v918
        %v921 = vld [vmem:[%s371] sm:$0xff]
        %v922 = vld [vmem:[%s371 + $0x8] sm:$0xff]
        %s923 = sld [smem:[#allocation2 + $0x306]]
        %v924 = vstv %s923
        %v925 = vmul.f32 %v921, %v924
        %v926 = vmul.f32 %v922, %v924
        %v927 = vadd.f32 %v919, %v925
        %v928 = vadd.f32 %v920, %v926
        %v929 = vld [vmem:[%s380] sm:$0xff]
        %v930 = vld [vmem:[%s380 + $0x8] sm:$0xff]
        %s931 = sld [smem:[#allocation2 + $0x307]]
        %v932 = vstv %s931
        %v933 = vmul.f32 %v929, %v932
        %v934 = vmul.f32 %v930, %v932
        %v935 = vadd.f32 %v927, %v933
        %v936 = vadd.f32 %v928, %v934
        %s937 = sld [smem:[#allocation5 + $0x6]]
        %v938 = vstv %s937
        %v939 = vadd.f32 %v935, %v938
        %v940 = vadd.f32 %v936, %v938
        %v941 = vmax.f32 %v939, 0.0
        %v942 = vmax.f32 %v940, 0.0
        %v943 = vmin.f32 %v941, 1.0
        %v944 = vmin.f32 %v942, 1.0
        %s945 = sld [smem:[#allocation7 + $0x6]]
        %s946 = sld [smem:[#allocation8 + $0x6]]
        %v947 = vstv %s945
        %v948 = vstv %s946
        %v949 = vsel %vm317, %v947, %v948
        %v950 = vsel %vm318, %v947, %v948
        %v951 = vsel %vm319, %v947, %v948
        %s952 = scalar_lea.vmem %s296, 144
        %953 = vst.msk [vmem:[%s952] sm:$0xff] %vm404, %v949
        %954 = vst.msk [vmem:[%s952 + $0x8] sm:$0xff] %vm404, %v950
        %955 = vst.msk [vmem:[%s952 + $0x10] sm:$0xf] %vm407, %v951
        %958 = vrot.lane.b32.xlu0 %v943, 2
        %v959 = vpop.permute.xlu0 %958
        %960 = vrot.lane.b32.xlu0 %v944, 2
        %v961 = vpop.permute.xlu0 %960
        %964 = vst.msk [vmem:[%s952 + $0x2] sm:$0xff] %vm417, %v959
        %965 = vst.msk [vmem:[%s952 + $0xa] sm:$0xff] %vm417, %v961
        %v966 = vld [vmem:[%s264] sm:$0xff]
        %v967 = vld [vmem:[%s264 + $0x8] sm:$0xff]
        %s968 = sld [smem:[#allocation2 + $0x380]]
        %v969 = vstv %s968
        %v970 = vmul.f32 %v966, %v969
        %v971 = vmul.f32 %v967, %v969
        %v972 = vld [vmem:[%s326] sm:$0xff]
        %v973 = vld [vmem:[%s326 + $0x8] sm:$0xff]
        %s974 = sld [smem:[#allocation2 + $0x381]]
        %v975 = vstv %s974
        %v976 = vmul.f32 %v972, %v975
        %v977 = vmul.f32 %v973, %v975
        %v978 = vadd.f32 %v970, %v976
        %v979 = vadd.f32 %v971, %v977
        %v980 = vld [vmem:[%s335] sm:$0xff]
        %v981 = vld [vmem:[%s335 + $0x8] sm:$0xff]
        %s982 = sld [smem:[#allocation2 + $0x382]]
        %v983 = vstv %s982
        %v984 = vmul.f32 %v980, %v983
        %v985 = vmul.f32 %v981, %v983
        %v986 = vadd.f32 %v978, %v984
        %v987 = vadd.f32 %v979, %v985
        %v988 = vld [vmem:[%s344] sm:$0xff]
        %v989 = vld [vmem:[%s344 + $0x8] sm:$0xff]
        %s990 = sld [smem:[#allocation2 + $0x383]]
        %v991 = vstv %s990
        %v992 = vmul.f32 %v988, %v991
        %v993 = vmul.f32 %v989, %v991
        %v994 = vadd.f32 %v986, %v992
        %v995 = vadd.f32 %v987, %v993
        %v996 = vld [vmem:[%s353] sm:$0xff]
        %v997 = vld [vmem:[%s353 + $0x8] sm:$0xff]
        %s998 = sld [smem:[#allocation2 + $0x384]]
        %v999 = vstv %s998
        %v1000 = vmul.f32 %v996, %v999
        %v1001 = vmul.f32 %v997, %v999
        %v1002 = vadd.f32 %v994, %v1000
        %v1003 = vadd.f32 %v995, %v1001
        %v1004 = vld [vmem:[%s362] sm:$0xff]
        %v1005 = vld [vmem:[%s362 + $0x8] sm:$0xff]
        %s1006 = sld [smem:[#allocation2 + $0x385]]
        %v1007 = vstv %s1006
        %v1008 = vmul.f32 %v1004, %v1007
        %v1009 = vmul.f32 %v1005, %v1007
        %v1010 = vadd.f32 %v1002, %v1008
        %v1011 = vadd.f32 %v1003, %v1009
        %v1012 = vld [vmem:[%s371] sm:$0xff]
        %v1013 = vld [vmem:[%s371 + $0x8] sm:$0xff]
        %s1014 = sld [smem:[#allocation2 + $0x386]]
        %v1015 = vstv %s1014
        %v1016 = vmul.f32 %v1012, %v1015
        %v1017 = vmul.f32 %v1013, %v1015
        %v1018 = vadd.f32 %v1010, %v1016
        %v1019 = vadd.f32 %v1011, %v1017
        %v1020 = vld [vmem:[%s380] sm:$0xff]
        %v1021 = vld [vmem:[%s380 + $0x8] sm:$0xff]
        %s1022 = sld [smem:[#allocation2 + $0x387]]
        %v1023 = vstv %s1022
        %v1024 = vmul.f32 %v1020, %v1023
        %v1025 = vmul.f32 %v1021, %v1023
        %v1026 = vadd.f32 %v1018, %v1024
        %v1027 = vadd.f32 %v1019, %v1025
        %s1028 = sld [smem:[#allocation5 + $0x7]]
        %v1029 = vstv %s1028
        %v1030 = vadd.f32 %v1026, %v1029
        %v1031 = vadd.f32 %v1027, %v1029
        %v1032 = vmax.f32 %v1030, 0.0
        %v1033 = vmax.f32 %v1031, 0.0
        %v1034 = vmin.f32 %v1032, 1.0
        %v1035 = vmin.f32 %v1033, 1.0
        %s1036 = sld [smem:[#allocation7 + $0x7]]
        %s1037 = sld [smem:[#allocation8 + $0x7]]
        %v1038 = vstv %s1036
        %v1039 = vstv %s1037
        %v1040 = vsel %vm317, %v1038, %v1039
        %v1041 = vsel %vm318, %v1038, %v1039
        %v1042 = vsel %vm319, %v1038, %v1039
        %s1043 = scalar_lea.vmem %s296, 168
        %1044 = vst.msk [vmem:[%s1043] sm:$0xff] %vm404, %v1040
        %1045 = vst.msk [vmem:[%s1043 + $0x8] sm:$0xff] %vm404, %v1041
        %1046 = vst.msk [vmem:[%s1043 + $0x10] sm:$0xf] %vm407, %v1042
        %1049 = vrot.lane.b32.xlu0 %v1034, 2
        %v1050 = vpop.permute.xlu0 %1049
        %1051 = vrot.lane.b32.xlu0 %v1035, 2
        %v1052 = vpop.permute.xlu0 %1051
        %1055 = vst.msk [vmem:[%s1043 + $0x2] sm:$0xff] %vm417, %v1050
        %1056 = vst.msk [vmem:[%s1043 + $0xa] sm:$0xff] %vm417, %v1052
        %p1057 = scmp.lt.s32.totalorder %s22, 1
        %s1058 = scalar_select %p1057, %s22, 1
        %s1059 = smul.addr %s1058, 24
        %s1060 = smul.addr %s1059, 8
        %s1061 = scalar_lea.vmem %s5, %s1060
        // Predicated region
        $region61: #{model_forward.1} parent=39 // pred_check
          %p1062 = pneg %p150
        $region62: #{model_forward.1} parent=39 // pred_check_branch
          %1064 = sbr.rel (%p1062) target = $region64
        $region63: #{model_forward.1} parent=39 // pred_region
          _
        $region64: #{model_forward.1} parent=39 // pred_fallthru
          _
      $region40: #{model_forward.1} parent=5 // pred_fallthru
        _
      %p1065 = scmp.le.s32.totalorder 2, %s17
      // Predicated region
      $region65: #{model_forward.1} parent=5 // pred_check
        %p1066 = pneg %p1065
      $region66: #{model_forward.1} parent=5 // pred_check_branch
        %1068 = sbr.rel (%p1066) target = $region68
      $region67: #{model_forward.1} parent=5 // pred_region
        %s1069 = ssub.s32 %s17, 2
        // Predicated region
        $region69: #{model_forward.1} parent=67 // pred_check
          %p1070 = pneg %p156
        $region70: #{model_forward.1} parent=67 // pred_check_branch
          %1072 = sbr.rel (%p1070) target = $region72
        $region71: #{model_forward.1} parent=67 // pred_region
          %p1073 = scmp.lt.s32.totalorder %s23, 1
          %s1074 = scalar_select %p1073, %s23, 1
          %s1075 = smul.addr %s1074, 24
          %s1076 = smul.addr %s1075, 8
          %s1077 = scalar_lea.vmem %s5, %s1076
        $region72: #{model_forward.1} parent=67 // pred_fallthru
          _
      $region68: #{model_forward.1} parent=5 // pred_fallthru
        _
    $region6: #{model_forward.1} parent=1 // loop_footer
      %s21 = sadd.s32 1, %s17
    $region7: #{model_forward.1} parent=1 // loop_footer_branch
      %16 = sbr.rel target = $region3
    $region8: #{model_forward.1} parent=1 // loop_exit
      _
    %1078 = vsyncpa [#allocation3], 1
    %s1079 = scalar_lea.sflag [#allocation3], 1
    %1080 = vsyncpa %s1079, 1
    %1081 = vsyncpa [#allocation4], 1
    %s1082 = scalar_lea.sflag [#allocation4], 1
    %1083 = vsyncpa %s1082, 1
    %1084 = vsyncpa [#allocation6], 1
    %1085 = vsyncpa [#allocation9], 1

</llo_original>
